<compile_context>
chip_gen: v5e
topology: v5e:2x2
jax: 0.10.0
libtpu: 0.0.40
codegen_flags: <defaults>
</compile_context>

<pallas_src>
import jax
import jax.numpy as jnp
from jax import lax
from jax.experimental import pallas as pl
from jax.experimental.pallas import tpu as pltpu

_LANE_PAD = 128  # lane-tile-aligned pad on both sides of the flat spatial axis


def _make_self_attention_kernel(dim, H, W):
    C3 = 3 * dim
    HW = H * W
    LPAD = _LANE_PAD
    PW = LPAD + HW + LPAD  # lane-aligned scratch width

    def kernel(x_ref, wqkv_ref, bqkv_ref, wdw_ref, bdw_ref, cmask_ref,
               temp_ref, hbias_ref, wpo_ref, bpo_ref, o_ref, pad_ref):
        f32 = jnp.float32
        bf16 = jnp.bfloat16

        # ---------------- 1x1 conv (qkv): (3C, C) @ (C, HW) ----------------
        # x and w_qkv arrive pre-cast to bf16; accumulate in f32.
        qkv = jnp.dot(wqkv_ref[...], x_ref[0],
                      preferred_element_type=f32)               # (3C, HW) f32
        qkv = qkv + bqkv_ref[...]

        # -------- depthwise 3x3 conv (VPU, flattened spatial axis) ---------
        # Zero only the two pad tiles (read by row-overflow taps, never
        # overwritten by the qkv store); then store qkv lane-aligned.  Each
        # tap is a static lane-offset slice; column wrap for dx=+-1 is killed
        # by the precomputed column masks, row overflow lands in the zeros.
        pad_ref[:, 0:LPAD] = jnp.zeros((C3, LPAD), f32)
        pad_ref[:, LPAD + HW:LPAD + HW + LPAD] = jnp.zeros((C3, LPAD), f32)
        pad_ref[:, LPAD:LPAD + HW] = qkv

        wdw = wdw_ref[...]                                      # (3C, 9) f32
        lmask = cmask_ref[0:1, :]                               # col >= 1
        rmask = cmask_ref[1:2, :]                               # col <= W-2

        acc = jnp.zeros((C3, HW), f32)
        for ky in range(3):
            for kx in range(3):
                dy, dx = ky - 1, kx - 1
                d = dy * W + dx
                tap = pad_ref[:, LPAD + d:LPAD + d + HW]        # (3C, HW)
                if dx == -1:
                    tap = tap * lmask
                elif dx == 1:
                    tap = tap * rmask
                t = ky * 3 + kx
                acc = acc + tap * wdw[:, t:t + 1]
        qkv_dw = acc + bdw_ref[...]                             # (3C, HW) f32

        # ----------------------- split q / k / v ---------------------------
        q = qkv_dw[0:dim, :]
        k = qkv_dw[dim:2 * dim, :]
        v = qkv_dw[2 * dim:3 * dim, :]

        def l2norm(t):
            ss = jnp.sum(t * t, axis=1, keepdims=True)
            return t * lax.rsqrt(ss + 1e-12)

        qn = l2norm(q).astype(bf16)                             # (C, HW)
        kn = l2norm(k).astype(bf16)

        # ------- channel attention, all heads batched (block-diagonal) -----
        logits = lax.dot_general(qn, kn, (((1,), (1,)), ((), ())),
                                 preferred_element_type=f32)    # (C, C)
        logits = logits * temp_ref[...] + hbias_ref[...]        # temp + (-inf)
        logits = logits - jnp.max(logits, axis=1, keepdims=True)
        p = jnp.exp(logits)
        attn = p * pl.reciprocal(jnp.sum(p, axis=1, keepdims=True), approx=True)

        # ---- fused project_out: y = (Wpo @ attn) @ v (one (C,HW) MXU pass) -
        w_eff = jnp.dot(wpo_ref[...], attn,
                        preferred_element_type=f32)             # (C, C) tiny
        y = jnp.dot(w_eff.astype(bf16), v.astype(bf16),
                    preferred_element_type=f32)                 # (C, HW)
        y = y + bpo_ref[...]
        o_ref[0] = y.astype(o_ref.dtype)                        # lane-dense

    return kernel


def self_attention_forward(x, params, num_heads):
    """x: (N, C, H, W) float32.  params in PyTorch layouts (see __main__)."""
    N, C, H, W = x.shape
    HW = H * W
    C3 = 3 * C
    cph = C // num_heads

    # Tiny parameter/layout prep.  MXU operands are pre-cast to bf16 ONCE here
    # instead of every grid step inside the kernel.
    w_qkv = params["qkv_w"].reshape(C3, C).astype(jnp.bfloat16)
    b_qkv = params["qkv_b"].reshape(C3, 1)
    w_dw = params["dw_w"].reshape(C3, 9)
    b_dw = params["dw_b"].reshape(C3, 1)
    temp = jnp.repeat(params["temperature"].reshape(num_heads), cph).reshape(C, 1)
    w_po = params["po_w"].reshape(C, C)
    b_po = params["po_b"].reshape(C, 1)

    # Precomputed masks/bias (keeps integer div/mod and selects out of kernel).
    col = jnp.arange(HW, dtype=jnp.int32) % W
    col_mask = jnp.stack([(col >= 1), (col <= W - 2)]).astype(jnp.float32)   # (2, HW)
    head_ids = jnp.arange(C, dtype=jnp.int32) // cph
    head_same = head_ids[:, None] == head_ids[None, :]
    head_bias = jnp.where(head_same, 0.0, -1e30).astype(jnp.float32)         # (C, C)

    # Contiguous reshape + one-time bf16 cast (halves x DMA into the kernel).
    x_flat = x.reshape(N, C, HW).astype(jnp.bfloat16)

    kernel = _make_self_attention_kernel(C, H, W)
    pw = 2 * _LANE_PAD + HW

    out = pl.pallas_call(
        kernel,
        out_shape=jax.ShapeDtypeStruct((N, C, HW), jnp.float32),
        grid_spec=pltpu.PrefetchScalarGridSpec(
            num_scalar_prefetch=0,
            grid=(N,),
            in_specs=[
                pl.BlockSpec((1, C, HW), lambda n: (n, 0, 0)),   # x (bf16)
                pl.BlockSpec((C3, C), lambda n: (0, 0)),         # qkv w (bf16)
                pl.BlockSpec((C3, 1), lambda n: (0, 0)),         # qkv b
                pl.BlockSpec((C3, 9), lambda n: (0, 0)),         # dw w
                pl.BlockSpec((C3, 1), lambda n: (0, 0)),         # dw b
                pl.BlockSpec((2, HW), lambda n: (0, 0)),         # col masks
                pl.BlockSpec((C, 1), lambda n: (0, 0)),          # temperature
                pl.BlockSpec((C, C), lambda n: (0, 0)),          # head bias
                pl.BlockSpec((C, C), lambda n: (0, 0)),          # proj w
                pl.BlockSpec((C, 1), lambda n: (0, 0)),          # proj b
            ],
            out_specs=pl.BlockSpec((1, C, HW), lambda n: (n, 0, 0)),
            scratch_shapes=[pltpu.VMEM((C3, pw), jnp.float32)],
        ),
        compiler_params=pltpu.CompilerParams(
            dimension_semantics=("parallel",)),
    )(x_flat, w_qkv, b_qkv, w_dw, b_dw, col_mask, temp, head_bias, w_po, b_po)

    return out.reshape(N, C, H, W)


def _reference_self_attention(x, params, num_heads):
    """Plain-JAX f32 reference mirroring the PyTorch module."""
    N, C, H, W = x.shape
    C3 = 3 * C
    cph = C // num_heads
    dn = ("NCHW", "OIHW", "NCHW")

    qkv = lax.conv_general_dilated(x, params["qkv_w"], (1, 1), ((0, 0), (0, 0)),
                                   dimension_numbers=dn)
    qkv = qkv + params["qkv_b"][None, :, None, None]
    qkv = lax.conv_general_dilated(qkv, params["dw_w"], (1, 1), ((1, 1), (1, 1)),
                                   dimension_numbers=dn, feature_group_count=C3)
    qkv = qkv + params["dw_b"][None, :, None, None]

    q, k, v = jnp.split(qkv, 3, axis=1)

    def to_heads(t):
        return t.reshape(N, num_heads, cph, H * W)

    q, k, v = to_heads(q), to_heads(k), to_heads(v)
    q = q / jnp.maximum(jnp.linalg.norm(q, axis=-1, keepdims=True), 1e-12)
    k = k / jnp.maximum(jnp.linalg.norm(k, axis=-1, keepdims=True), 1e-12)

    attn = jnp.einsum("nhcs,nhds->nhcd", q, k) * params["temperature"][None]
    attn = jax.nn.softmax(attn, axis=-1)
    out = jnp.einsum("nhcd,nhds->nhcs", attn, v)
    out = out.reshape(N, C, H, W)

    out = lax.conv_general_dilated(out, params["po_w"], (1, 1), ((0, 0), (0, 0)),
                                   dimension_numbers=dn)
    return out + params["po_b"][None, :, None, None]


if __name__ == "__main__":
    key = jax.random.PRNGKey(0)
    keys = jax.random.split(key, 8)

    N, C, H, W = 2, 16, 16, 16     # batch=2, dim=16, spatial=16x16
    num_heads = 4
    C3 = 3 * C

    def uni(k, shape, bound):
        return jax.random.uniform(k, shape, jnp.float32, -bound, bound)

    # Pre-round test data to bf16-representable values so the bf16 operand
    # casts are exact (keeps the f32 reference comparison tight).
    def bf16_grid(t):
        return t.astype(jnp.bfloat16).astype(jnp.float32)

    x = bf16_grid(jax.random.normal(keys[0], (N, C, H, W), jnp.float32))
    params = {
        "qkv_w": bf16_grid(uni(keys[1], (C3, C, 1, 1), 1.0 / (C ** 0.5))),
        "qkv_b": bf16_grid(uni(keys[2], (C3,), 1.0 / (C ** 0.5))),
        "dw_w": bf16_grid(uni(keys[3], (C3, 1, 3, 3), 1.0 / 3.0)),
        "dw_b": bf16_grid(uni(keys[4], (C3,), 1.0 / 3.0)),
        "temperature": bf16_grid(
            1.0 + 0.1 * jax.random.normal(keys[5], (num_heads, 1, 1), jnp.float32)),
        "po_w": bf16_grid(uni(keys[6], (C, C, 1, 1), 1.0 / (C ** 0.5))),
        "po_b": bf16_grid(uni(keys[7], (C,), 1.0 / (C ** 0.5))),
    }

    out = jax.block_until_ready(self_attention_forward(x, params, num_heads))
    ref = jax.block_until_ready(_reference_self_attention(x, params, num_heads))

    assert out.shape == (N, C, H, W), out.shape
    max_err = float(jnp.max(jnp.abs(out - ref)))
    # Tolerance covers bf16 MXU operand rounding (q/k/v, attn->Wpo fusion);
    # accumulation is f32 throughout.
    assert bool(jnp.allclose(out, ref, atol=4e-2, rtol=4e-2)), max_err

    print("KERNEL_OK")
</pallas_src>

<mosaic_0001>
module attributes {stable_mosaic.version = 11 : i64} {
  func.func @kernel(%arg0: i32, %arg1: memref<1x16x256xbf16, #tpu.memory_space<vmem>>, %arg2: memref<48x16xbf16, #tpu.memory_space<vmem>>, %arg3: memref<48x1xf32, #tpu.memory_space<vmem>>, %arg4: memref<48x9xf32, #tpu.memory_space<vmem>>, %arg5: memref<48x1xf32, #tpu.memory_space<vmem>>, %arg6: memref<2x256xf32, #tpu.memory_space<vmem>>, %arg7: memref<16x1xf32, #tpu.memory_space<vmem>>, %arg8: memref<16x16xf32, #tpu.memory_space<vmem>>, %arg9: memref<16x16xf32, #tpu.memory_space<vmem>>, %arg10: memref<16x1xf32, #tpu.memory_space<vmem>>, %arg11: memref<1x16x256xf32, #tpu.memory_space<vmem>>, %arg12: memref<48x512xf32, #tpu.memory_space<vmem>>) attributes {dimension_semantics = [#tpu.dimension_semantics<parallel>], iteration_bounds = array<i64: 2>, scalar_prefetch = 0 : i64, scratch_operands = 1 : i64, tpu.core_type = #tpu.core_type<tc>, window_params = [{transform_indices = @transform_0, window_bounds = array<i64: 1, 16, 256>}, {pipeline_mode = #tpu.pipeline_mode<synchronous>, transform_indices = @transform_1, window_bounds = array<i64: 48, 16>}, {pipeline_mode = #tpu.pipeline_mode<synchronous>, transform_indices = @transform_2, window_bounds = array<i64: 48, 1>}, {pipeline_mode = #tpu.pipeline_mode<synchronous>, transform_indices = @transform_3, window_bounds = array<i64: 48, 9>}, {pipeline_mode = #tpu.pipeline_mode<synchronous>, transform_indices = @transform_4, window_bounds = array<i64: 48, 1>}, {pipeline_mode = #tpu.pipeline_mode<synchronous>, transform_indices = @transform_5, window_bounds = array<i64: 2, 256>}, {pipeline_mode = #tpu.pipeline_mode<synchronous>, transform_indices = @transform_6, window_bounds = array<i64: 16, 1>}, {pipeline_mode = #tpu.pipeline_mode<synchronous>, transform_indices = @transform_7, window_bounds = array<i64: 16, 16>}, {pipeline_mode = #tpu.pipeline_mode<synchronous>, transform_indices = @transform_8, window_bounds = array<i64: 16, 16>}, {pipeline_mode = #tpu.pipeline_mode<synchronous>, transform_indices = @transform_9, window_bounds = array<i64: 16, 1>}, {transform_indices = @transform_10, window_bounds = array<i64: 1, 16, 256>}]} {
    %c0 = arith.constant 0 : index
    %c0_0 = arith.constant 0 : index
    %0 = vector.load %arg2[%c0, %c0_0] : memref<48x16xbf16, #tpu.memory_space<vmem>>, vector<48x16xbf16>
    %c0_1 = arith.constant 0 : index
    %c0_2 = arith.constant 0 : index
    %c0_3 = arith.constant 0 : index
    %1 = vector.load %arg1[%c0_1, %c0_2, %c0_3] : memref<1x16x256xbf16, #tpu.memory_space<vmem>>, vector<1x16x256xbf16>
    %2 = vector.shape_cast %1 : vector<1x16x256xbf16> to vector<16x256xbf16>
    %cst = arith.constant dense<0.000000e+00> : vector<48x256xf32>
    %3 = tpu.matmul %0, %2, %cst {dimension_numbers = #tpu.dot_dimension_numbers<[1], [0], [0], [1], [0, 0, 1, 1], [], []>} : vector<48x16xbf16>, vector<16x256xbf16>, vector<48x256xf32> -> vector<48x256xf32>
    %c0_4 = arith.constant 0 : index
    %c0_5 = arith.constant 0 : index
    %4 = vector.load %arg3[%c0_4, %c0_5] : memref<48x1xf32, #tpu.memory_space<vmem>>, vector<48x1xf32>
    %5 = vector.broadcast %4 : vector<48x1xf32> to vector<48x256xf32>
    %6 = arith.addf %3, %5 : vector<48x256xf32>
    %cst_6 = arith.constant 0.000000e+00 : f32
    %7 = vector.broadcast %cst_6 : f32 to vector<48x128xf32>
    %c0_7 = arith.constant 0 : index
    %c0_8 = arith.constant 0 : index
    %8 = vector.load %arg12[%c0_7, %c0_8] : memref<48x512xf32, #tpu.memory_space<vmem>>, vector<48x128xf32>
    tpu.vector_store %arg12[%c0_7, %c0_8], %7 {strides = array<i32>} : memref<48x512xf32, #tpu.memory_space<vmem>>, vector<48x128xf32>,
    %cst_9 = arith.constant 0.000000e+00 : f32
    %9 = vector.broadcast %cst_9 : f32 to vector<48x128xf32>
    %c0_10 = arith.constant 0 : index
    %c384 = arith.constant 384 : index
    %10 = vector.load %arg12[%c0_10, %c384] : memref<48x512xf32, #tpu.memory_space<vmem>>, vector<48x128xf32>
    tpu.vector_store %arg12[%c0_10, %c384], %9 {strides = array<i32>} : memref<48x512xf32, #tpu.memory_space<vmem>>, vector<48x128xf32>,
    %c0_11 = arith.constant 0 : index
    %c128 = arith.constant 128 : index
    %11 = vector.load %arg12[%c0_11, %c128] : memref<48x512xf32, #tpu.memory_space<vmem>>, vector<48x256xf32>
    tpu.vector_store %arg12[%c0_11, %c128], %6 {strides = array<i32>} : memref<48x512xf32, #tpu.memory_space<vmem>>, vector<48x256xf32>,
    %c0_12 = arith.constant 0 : index
    %c0_13 = arith.constant 0 : index
    %12 = vector.load %arg4[%c0_12, %c0_13] : memref<48x9xf32, #tpu.memory_space<vmem>>, vector<48x9xf32>
    %c0_14 = arith.constant 0 : index
    %c0_15 = arith.constant 0 : index
    %13 = vector.load %arg6[%c0_14, %c0_15] : memref<2x256xf32, #tpu.memory_space<vmem>>, vector<1x256xf32>
    %c1 = arith.constant 1 : index
    %c0_16 = arith.constant 0 : index
    %14 = vector.load %arg6[%c1, %c0_16] : memref<2x256xf32, #tpu.memory_space<vmem>>, vector<1x256xf32>
    %cst_17 = arith.constant 0.000000e+00 : f32
    %15 = vector.broadcast %cst_17 : f32 to vector<48x256xf32>
    %c0_18 = arith.constant 0 : index
    %c111 = arith.constant 111 : index
    %16 = vector.load %arg12[%c0_18, %c111] : memref<48x512xf32, #tpu.memory_space<vmem>>, vector<48x256xf32>
    %17 = vector.broadcast %13 : vector<1x256xf32> to vector<48x256xf32>
    %18 = arith.mulf %16, %17 : vector<48x256xf32>
    %19 = vector.extract_strided_slice %12 {offsets = [0, 0], sizes = [48, 1], strides = [1, 1]} : vector<48x9xf32> to vector<48x1xf32>
    %20 = vector.broadcast %19 : vector<48x1xf32> to vector<48x256xf32>
    %21 = arith.mulf %18, %20 : vector<48x256xf32>
    %22 = arith.addf %15, %21 : vector<48x256xf32>
    %c0_19 = arith.constant 0 : index
    %c112 = arith.constant 112 : index
    %23 = vector.load %arg12[%c0_19, %c112] : memref<48x512xf32, #tpu.memory_space<vmem>>, vector<48x256xf32>
    %24 = vector.extract_strided_slice %12 {offsets = [0, 1], sizes = [48, 1], strides = [1, 1]} : vector<48x9xf32> to vector<48x1xf32>
    %25 = vector.broadcast %24 : vector<48x1xf32> to vector<48x256xf32>
    %26 = arith.mulf %23, %25 : vector<48x256xf32>
    %27 = arith.addf %22, %26 : vector<48x256xf32>
    %c0_20 = arith.constant 0 : index
    %c113 = arith.constant 113 : index
    %28 = vector.load %arg12[%c0_20, %c113] : memref<48x512xf32, #tpu.memory_space<vmem>>, vector<48x256xf32>
    %29 = vector.broadcast %14 : vector<1x256xf32> to vector<48x256xf32>
    %30 = arith.mulf %28, %29 : vector<48x256xf32>
    %31 = vector.extract_strided_slice %12 {offsets = [0, 2], sizes = [48, 1], strides = [1, 1]} : vector<48x9xf32> to vector<48x1xf32>
    %32 = vector.broadcast %31 : vector<48x1xf32> to vector<48x256xf32>
    %33 = arith.mulf %30, %32 : vector<48x256xf32>
    %34 = arith.addf %27, %33 : vector<48x256xf32>
    %c0_21 = arith.constant 0 : index
    %c127 = arith.constant 127 : index
    %35 = vector.load %arg12[%c0_21, %c127] : memref<48x512xf32, #tpu.memory_space<vmem>>, vector<48x256xf32>
    %36 = vector.broadcast %13 : vector<1x256xf32> to vector<48x256xf32>
    %37 = arith.mulf %35, %36 : vector<48x256xf32>
    %38 = vector.extract_strided_slice %12 {offsets = [0, 3], sizes = [48, 1], strides = [1, 1]} : vector<48x9xf32> to vector<48x1xf32>
    %39 = vector.broadcast %38 : vector<48x1xf32> to vector<48x256xf32>
    %40 = arith.mulf %37, %39 : vector<48x256xf32>
    %41 = arith.addf %34, %40 : vector<48x256xf32>
    %c0_22 = arith.constant 0 : index
    %c128_23 = arith.constant 128 : index
    %42 = vector.load %arg12[%c0_22, %c128_23] : memref<48x512xf32, #tpu.memory_space<vmem>>, vector<48x256xf32>
    %43 = vector.extract_strided_slice %12 {offsets = [0, 4], sizes = [48, 1], strides = [1, 1]} : vector<48x9xf32> to vector<48x1xf32>
    %44 = vector.broadcast %43 : vector<48x1xf32> to vector<48x256xf32>
    %45 = arith.mulf %42, %44 : vector<48x256xf32>
    %46 = arith.addf %41, %45 : vector<48x256xf32>
    %c0_24 = arith.constant 0 : index
    %c129 = arith.constant 129 : index
    %47 = vector.load %arg12[%c0_24, %c129] : memref<48x512xf32, #tpu.memory_space<vmem>>, vector<48x256xf32>
    %48 = vector.broadcast %14 : vector<1x256xf32> to vector<48x256xf32>
    %49 = arith.mulf %47, %48 : vector<48x256xf32>
    %50 = vector.extract_strided_slice %12 {offsets = [0, 5], sizes = [48, 1], strides = [1, 1]} : vector<48x9xf32> to vector<48x1xf32>
    %51 = vector.broadcast %50 : vector<48x1xf32> to vector<48x256xf32>
    %52 = arith.mulf %49, %51 : vector<48x256xf32>
    %53 = arith.addf %46, %52 : vector<48x256xf32>
    %c0_25 = arith.constant 0 : index
    %c143 = arith.constant 143 : index
    %54 = vector.load %arg12[%c0_25, %c143] : memref<48x512xf32, #tpu.memory_space<vmem>>, vector<48x256xf32>
    %55 = vector.broadcast %13 : vector<1x256xf32> to vector<48x256xf32>
    %56 = arith.mulf %54, %55 : vector<48x256xf32>
    %57 = vector.extract_strided_slice %12 {offsets = [0, 6], sizes = [48, 1], strides = [1, 1]} : vector<48x9xf32> to vector<48x1xf32>
    %58 = vector.broadcast %57 : vector<48x1xf32> to vector<48x256xf32>
    %59 = arith.mulf %56, %58 : vector<48x256xf32>
    %60 = arith.addf %53, %59 : vector<48x256xf32>
    %c0_26 = arith.constant 0 : index
    %c144 = arith.constant 144 : index
    %61 = vector.load %arg12[%c0_26, %c144] : memref<48x512xf32, #tpu.memory_space<vmem>>, vector<48x256xf32>
    %62 = vector.extract_strided_slice %12 {offsets = [0, 7], sizes = [48, 1], strides = [1, 1]} : vector<48x9xf32> to vector<48x1xf32>
    %63 = vector.broadcast %62 : vector<48x1xf32> to vector<48x256xf32>
    %64 = arith.mulf %61, %63 : vector<48x256xf32>
    %65 = arith.addf %60, %64 : vector<48x256xf32>
    %c0_27 = arith.constant 0 : index
    %c145 = arith.constant 145 : index
    %66 = vector.load %arg12[%c0_27, %c145] : memref<48x512xf32, #tpu.memory_space<vmem>>, vector<48x256xf32>
    %67 = vector.broadcast %14 : vector<1x256xf32> to vector<48x256xf32>
    %68 = arith.mulf %66, %67 : vector<48x256xf32>
    %69 = vector.extract_strided_slice %12 {offsets = [0, 8], sizes = [48, 1], strides = [1, 1]} : vector<48x9xf32> to vector<48x1xf32>
    %70 = vector.broadcast %69 : vector<48x1xf32> to vector<48x256xf32>
    %71 = arith.mulf %68, %70 : vector<48x256xf32>
    %72 = arith.addf %65, %71 : vector<48x256xf32>
    %c0_28 = arith.constant 0 : index
    %c0_29 = arith.constant 0 : index
    %73 = vector.load %arg5[%c0_28, %c0_29] : memref<48x1xf32, #tpu.memory_space<vmem>>, vector<48x1xf32>
    %74 = vector.broadcast %73 : vector<48x1xf32> to vector<48x256xf32>
    %75 = arith.addf %72, %74 : vector<48x256xf32>
    %76 = vector.extract_strided_slice %75 {offsets = [0, 0], sizes = [16, 256], strides = [1, 1]} : vector<48x256xf32> to vector<16x256xf32>
    %77 = vector.extract_strided_slice %75 {offsets = [16, 0], sizes = [16, 256], strides = [1, 1]} : vector<48x256xf32> to vector<16x256xf32>
    %78 = vector.extract_strided_slice %75 {offsets = [32, 0], sizes = [16, 256], strides = [1, 1]} : vector<48x256xf32> to vector<16x256xf32>
    %79 = arith.mulf %76, %76 : vector<16x256xf32>
    %cst_30 = arith.constant dense<0.000000e+00> : vector<16xf32>
    %80 = vector.multi_reduction <add>, %79, %cst_30 [1] : vector<16x256xf32> to vector<16xf32>
    %81 = vector.shape_cast %80 : vector<16xf32> to vector<16x1xf32>
    %cst_31 = arith.constant 9.99999996E-13 : f32
    %82 = vector.broadcast %cst_31 : f32 to vector<16x1xf32>
    %83 = arith.addf %81, %82 : vector<16x1xf32>
    %84 = math.rsqrt %83 : vector<16x1xf32>
    %85 = vector.broadcast %84 : vector<16x1xf32> to vector<16x256xf32>
    %86 = arith.mulf %76, %85 : vector<16x256xf32>
    %87 = arith.truncf %86 : vector<16x256xf32> to vector<16x256xbf16>
    %88 = arith.mulf %77, %77 : vector<16x256xf32>
    %cst_32 = arith.constant dense<0.000000e+00> : vector<16xf32>
    %89 = vector.multi_reduction <add>, %88, %cst_32 [1] : vector<16x256xf32> to vector<16xf32>
    %90 = vector.shape_cast %89 : vector<16xf32> to vector<16x1xf32>
    %cst_33 = arith.constant 9.99999996E-13 : f32
    %91 = vector.broadcast %cst_33 : f32 to vector<16x1xf32>
    %92 = arith.addf %90, %91 : vector<16x1xf32>
    %93 = math.rsqrt %92 : vector<16x1xf32>
    %94 = vector.broadcast %93 : vector<16x1xf32> to vector<16x256xf32>
    %95 = arith.mulf %77, %94 : vector<16x256xf32>
    %96 = arith.truncf %95 : vector<16x256xf32> to vector<16x256xbf16>
    %cst_34 = arith.constant dense<0.000000e+00> : vector<16x16xf32>
    %97 = tpu.matmul %87, %96, %cst_34 {dimension_numbers = #tpu.dot_dimension_numbers<[1], [1], [0], [0], [0, 0, 1, 0], [], []>} : vector<16x256xbf16>, vector<16x256xbf16>, vector<16x16xf32> -> vector<16x16xf32>
    %c0_35 = arith.constant 0 : index
    %c0_36 = arith.constant 0 : index
    %98 = vector.load %arg7[%c0_35, %c0_36] : memref<16x1xf32, #tpu.memory_space<vmem>>, vector<16x1xf32>
    %99 = vector.broadcast %98 : vector<16x1xf32> to vector<16x16xf32>
    %100 = arith.mulf %97, %99 : vector<16x16xf32>
    %c0_37 = arith.constant 0 : index
    %c0_38 = arith.constant 0 : index
    %101 = vector.load %arg8[%c0_37, %c0_38] : memref<16x16xf32, #tpu.memory_space<vmem>>, vector<16x16xf32>
    %102 = arith.addf %100, %101 : vector<16x16xf32>
    %cst_39 = arith.constant dense<0xFF800000> : vector<16xf32>
    %103 = vector.multi_reduction <maximumf>, %102, %cst_39 [1] : vector<16x16xf32> to vector<16xf32>
    %104 = vector.shape_cast %103 : vector<16xf32> to vector<16x1xf32>
    %105 = vector.broadcast %104 : vector<16x1xf32> to vector<16x16xf32>
    %106 = arith.subf %102, %105 : vector<16x16xf32>
    %107 = math.exp %106 : vector<16x16xf32>
    %cst_40 = arith.constant dense<0.000000e+00> : vector<16xf32>
    %108 = vector.multi_reduction <add>, %107, %cst_40 [1] : vector<16x16xf32> to vector<16xf32>
    %109 = vector.shape_cast %108 : vector<16xf32> to vector<16x1xf32>
    %110 = tpu.reciprocal %109 {approx = true} : vector<16x1xf32> -> vector<16x1xf32>
    %111 = vector.broadcast %110 : vector<16x1xf32> to vector<16x16xf32>
    %112 = arith.mulf %107, %111 : vector<16x16xf32>
    %c0_41 = arith.constant 0 : index
    %c0_42 = arith.constant 0 : index
    %113 = vector.load %arg9[%c0_41, %c0_42] : memref<16x16xf32, #tpu.memory_space<vmem>>, vector<16x16xf32>
    %cst_43 = arith.constant dense<0.000000e+00> : vector<16x16xf32>
    %114 = tpu.matmul %113, %112, %cst_43 {dimension_numbers = #tpu.dot_dimension_numbers<[1], [0], [0], [1], [0, 0, 1, 1], [], []>} : vector<16x16xf32>, vector<16x16xf32>, vector<16x16xf32> -> vector<16x16xf32>
    %115 = arith.truncf %114 : vector<16x16xf32> to vector<16x16xbf16>
    %116 = arith.truncf %78 : vector<16x256xf32> to vector<16x256xbf16>
    %cst_44 = arith.constant dense<0.000000e+00> : vector<16x256xf32>
    %117 = tpu.matmul %115, %116, %cst_44 {dimension_numbers = #tpu.dot_dimension_numbers<[1], [0], [0], [1], [0, 0, 1, 1], [], []>} : vector<16x16xbf16>, vector<16x256xbf16>, vector<16x256xf32> -> vector<16x256xf32>
    %c0_45 = arith.constant 0 : index
    %c0_46 = arith.constant 0 : index
    %118 = vector.load %arg10[%c0_45, %c0_46] : memref<16x1xf32, #tpu.memory_space<vmem>>, vector<16x1xf32>
    %119 = vector.broadcast %118 : vector<16x1xf32> to vector<16x256xf32>
    %120 = arith.addf %117, %119 : vector<16x256xf32>
    %c0_47 = arith.constant 0 : index
    %c0_48 = arith.constant 0 : index
    %c0_49 = arith.constant 0 : index
    %121 = vector.load %arg11[%c0_47, %c0_48, %c0_49] : memref<1x16x256xf32, #tpu.memory_space<vmem>>, vector<1x16x256xf32>
    %122 = vector.shape_cast %121 : vector<1x16x256xf32> to vector<16x256xf32>
    %123 = vector.shape_cast %120 : vector<16x256xf32> to vector<1x16x256xf32>
    tpu.vector_store %arg11[%c0_47, %c0_48, %c0_49], %123 {strides = array<i32>} : memref<1x16x256xf32, #tpu.memory_space<vmem>>, vector<1x16x256xf32>,
    return
  }
  func.func @transform_0(%arg0: i32) -> (i32, i32, i32) {
    %c0_i32 = arith.constant 0 : i32
    %c0_i32_0 = arith.constant 0 : i32
    %c0_i32_1 = arith.constant 0 : i32
    return %arg0, %c0_i32, %c0_i32_0 : i32, i32, i32
  }
  func.func @transform_1(%arg0: i32) -> (i32, i32) {
    %c0_i32 = arith.constant 0 : i32
    %c0_i32_0 = arith.constant 0 : i32
    %c0_i32_1 = arith.constant 0 : i32
    return %c0_i32, %c0_i32_0 : i32, i32
  }
  func.func @transform_2(%arg0: i32) -> (i32, i32) {
    %c0_i32 = arith.constant 0 : i32
    %c0_i32_0 = arith.constant 0 : i32
    %c0_i32_1 = arith.constant 0 : i32
    return %c0_i32, %c0_i32_0 : i32, i32
  }
  func.func @transform_3(%arg0: i32) -> (i32, i32) {
    %c0_i32 = arith.constant 0 : i32
    %c0_i32_0 = arith.constant 0 : i32
    %c0_i32_1 = arith.constant 0 : i32
    return %c0_i32, %c0_i32_0 : i32, i32
  }
  func.func @transform_4(%arg0: i32) -> (i32, i32) {
    %c0_i32 = arith.constant 0 : i32
    %c0_i32_0 = arith.constant 0 : i32
    %c0_i32_1 = arith.constant 0 : i32
    return %c0_i32, %c0_i32_0 : i32, i32
  }
  func.func @transform_5(%arg0: i32) -> (i32, i32) {
    %c0_i32 = arith.constant 0 : i32
    %c0_i32_0 = arith.constant 0 : i32
    %c0_i32_1 = arith.constant 0 : i32
    return %c0_i32, %c0_i32_0 : i32, i32
  }
  func.func @transform_6(%arg0: i32) -> (i32, i32) {
    %c0_i32 = arith.constant 0 : i32
    %c0_i32_0 = arith.constant 0 : i32
    %c0_i32_1 = arith.constant 0 : i32
    return %c0_i32, %c0_i32_0 : i32, i32
  }
  func.func @transform_7(%arg0: i32) -> (i32, i32) {
    %c0_i32 = arith.constant 0 : i32
    %c0_i32_0 = arith.constant 0 : i32
    %c0_i32_1 = arith.constant 0 : i32
    return %c0_i32, %c0_i32_0 : i32, i32
  }
  func.func @transform_8(%arg0: i32) -> (i32, i32) {
    %c0_i32 = arith.constant 0 : i32
    %c0_i32_0 = arith.constant 0 : i32
    %c0_i32_1 = arith.constant 0 : i32
    return %c0_i32, %c0_i32_0 : i32, i32
  }
  func.func @transform_9(%arg0: i32) -> (i32, i32) {
    %c0_i32 = arith.constant 0 : i32
    %c0_i32_0 = arith.constant 0 : i32
    %c0_i32_1 = arith.constant 0 : i32
    return %c0_i32, %c0_i32_0 : i32, i32
  }
  func.func @transform_10(%arg0: i32) -> (i32, i32, i32) {
    %c0_i32 = arith.constant 0 : i32
    %c0_i32_0 = arith.constant 0 : i32
    %c0_i32_1 = arith.constant 0 : i32
    return %arg0, %c0_i32, %c0_i32_0 : i32, i32, i32
  }
}

</mosaic_0001>

<llo_original>
// kernel: tpu_custom_call.1
$region0: #{tpu_custom_call.1}
  #allocation0 [shape = 'u32[]', space=smem, size = 0x4, offset = 0x4, fixed_abs, tag = 'smem constant byte address 0x4 - core index']
  #allocation1 [shape = 'u32[72,128]{1,0:T(1,128)}', space=vmem, size = 0x9000, scoped, tag = 'internal scratch']
  #allocation2 [shape = 'f32[48,512]{1,0:T(8,128)}', space=vmem, size = 0x18000, scoped, tag = 'scratch operand']
  %s0 = inlined_call_operand.vmem [shape: bf16[2,16,256], index: 0, kind: input, shape index: {}]
  %s1 = inlined_call_operand.vmem [shape: bf16[48,16], index: 1, kind: input, shape index: {}]
  %s2 = inlined_call_operand.vmem [shape: f32[48,1], index: 2, kind: input, shape index: {}]
  %s3 = inlined_call_operand.vmem [shape: f32[48,9], index: 3, kind: input, shape index: {}]
  %s4 = inlined_call_operand.vmem [shape: f32[48,1], index: 4, kind: input, shape index: {}]
  %s5 = inlined_call_operand.vmem [shape: f32[2,256], index: 5, kind: input, shape index: {}]
  %s6 = inlined_call_operand.vmem [shape: f32[16,1], index: 6, kind: input, shape index: {}]
  %s7 = inlined_call_operand.vmem [shape: f32[16,16], index: 7, kind: input, shape index: {}]
  %s8 = inlined_call_operand.vmem [shape: f32[16,16], index: 8, kind: input, shape index: {}]
  %s9 = inlined_call_operand.vmem [shape: f32[16,1], index: 9, kind: input, shape index: {}]
  %s10 = inlined_call_operand.hbm [shape: f32[2,16,256], index: 10, kind: output, shape index: {}]
  %s11 = sld [smem:[#allocation0]]
  $region73: #{tpu_custom_call.1} parent=0
    _
  %s13 = ssub.s32 1, %s11
  %s14 = scalar_select 0, %s13, %s11
  $region1: #{tpu_custom_call.1} parent=0
    #allocation3 [shape = 'u8[32768]{0}', space=vmem, size = 0x8000, scoped, tag = 'output window, operand 0']
    #allocation4 [shape = 's32[2]{0}', space=sflag, size = 0x8, scoped, tag = 'scoped memory for tpu_custom_call.1']
    %15 = vsyncpa [#allocation4], 0
    %s16 = scalar_lea.sflag [#allocation4], 1
    %17 = vsyncpa %s16, 0
    loop: start=0, step=1, limit=4
    $region2: #{tpu_custom_call.1} parent=1 // loop_pre_header
      _
    $region3: #{tpu_custom_call.1} parent=1 // loop_header
      %s19 = sphi 0, %s23
      %p20 = scmp.ge.s32.totalorder %s19, 4
      %s29 = sphi 0, %s31
      %s32 = sphi 0, %s29
      %s33 = sphi 0, %s32
      %s49 = sphi 0, %s33
      %s53 = sphi 0, %s53
      %s55 = sphi 0, %s53
      %s56 = sphi 0, %s55
      %s70 = sphi 0, %s56
      %s74 = sphi 0, %s74
      %s76 = sphi 0, %s74
      %s77 = sphi 0, %s76
      %s91 = sphi 0, %s77
      %s95 = sphi 0, %s95
      %s97 = sphi 0, %s95
      %s98 = sphi 0, %s97
      %s112 = sphi 0, %s98
      %s116 = sphi 0, %s116
      %s118 = sphi 0, %s116
      %s119 = sphi 0, %s118
      %s133 = sphi 0, %s119
      %s137 = sphi 0, %s137
      %s139 = sphi 0, %s137
      %s140 = sphi 0, %s139
      %s154 = sphi 0, %s140
      %s158 = sphi 0, %s158
      %s160 = sphi 0, %s158
      %s161 = sphi 0, %s160
      %s175 = sphi 0, %s161
      %s179 = sphi 0, %s179
      %s181 = sphi 0, %s179
      %s182 = sphi 0, %s181
      %s196 = sphi 0, %s182
      %s200 = sphi 0, %s200
      %s202 = sphi 0, %s200
      %s203 = sphi 0, %s202
      %s217 = sphi 0, %s203
      %s221 = sphi 0, %s221
      %s223 = sphi 0, %s221
      %s224 = sphi 0, %s223
      %s238 = sphi 0, %s224
      %s244 = sphi 0, %s246
      %s247 = sphi 0, %s244
      %s248 = sphi 0, %s247
      %s264 = sphi 0, %s248
    $region4: #{tpu_custom_call.1} parent=1 // loop_header_branch
      %22 = sbr.rel (%p20) target = $region8
    $region5: #{tpu_custom_call.1} parent=1 // loop_body
      %s24 = ssub.s32 %s19, 1
      %s25 = ssub.s32 %s19, 2
      %s26 = sadd.s32 %s19, 1
      %s27 = ssub.s32 %s19, %s26
      %p28 = scmp.eq.s32.totalorder %s27, 0
      %s30 = sadd.s32 %s29, 1
      %s31 = scalar_select %p28, %s29, %s30
      %p34 = pneg %p28
      %p35 = scmp.eq.s32.totalorder %s19, 1
      %p36 = por %p34, %p35
      %p37 = scmp.ne.s32.totalorder %s29, %s32
      %p38 = scmp.eq.s32.totalorder %s19, 0
      %p39 = por %p37, %p38
      %p40 = scmp.ne.s32.totalorder %s29, %s32
      %p41 = scmp.eq.s32.totalorder %s24, 1
      %p42 = por %p40, %p41
      %p43 = scmp.ne.s32.totalorder %s32, %s33
      %p44 = scmp.eq.s32.totalorder %s24, 0
      %p45 = por %p43, %p44
      %p46 = scmp.ne.s32.totalorder %s32, %s33
      %p47 = scmp.eq.s32.totalorder %s25, 1
      %p48 = por %p46, %p47
      %p50 = scmp.ne.s32.totalorder %s33, %s49
      %p51 = scmp.eq.s32.totalorder %s25, 0
      %p52 = por %p50, %p51
      %s54 = sadd.s32 %s53, 1
      %p57 = scmp.eq.s32.totalorder %s19, 1
      %p58 = scmp.ne.s32.totalorder %s53, %s55
      %p59 = scmp.eq.s32.totalorder %s19, 0
      %p60 = por %p58, %p59
      %p61 = scmp.ne.s32.totalorder %s53, %s55
      %p62 = scmp.eq.s32.totalorder %s24, 1
      %p63 = por %p61, %p62
      %p64 = scmp.ne.s32.totalorder %s55, %s56
      %p65 = scmp.eq.s32.totalorder %s24, 0
      %p66 = por %p64, %p65
      %p67 = scmp.ne.s32.totalorder %s55, %s56
      %p68 = scmp.eq.s32.totalorder %s25, 1
      %p69 = por %p67, %p68
      %p71 = scmp.ne.s32.totalorder %s56, %s70
      %p72 = scmp.eq.s32.totalorder %s25, 0
      %p73 = por %p71, %p72
      %s75 = sadd.s32 %s74, 1
      %p78 = scmp.eq.s32.totalorder %s19, 1
      %p79 = scmp.ne.s32.totalorder %s74, %s76
      %p80 = scmp.eq.s32.totalorder %s19, 0
      %p81 = por %p79, %p80
      %p82 = scmp.ne.s32.totalorder %s74, %s76
      %p83 = scmp.eq.s32.totalorder %s24, 1
      %p84 = por %p82, %p83
      %p85 = scmp.ne.s32.totalorder %s76, %s77
      %p86 = scmp.eq.s32.totalorder %s24, 0
      %p87 = por %p85, %p86
      %p88 = scmp.ne.s32.totalorder %s76, %s77
      %p89 = scmp.eq.s32.totalorder %s25, 1
      %p90 = por %p88, %p89
      %p92 = scmp.ne.s32.totalorder %s77, %s91
      %p93 = scmp.eq.s32.totalorder %s25, 0
      %p94 = por %p92, %p93
      %s96 = sadd.s32 %s95, 1
      %p99 = scmp.eq.s32.totalorder %s19, 1
      %p100 = scmp.ne.s32.totalorder %s95, %s97
      %p101 = scmp.eq.s32.totalorder %s19, 0
      %p102 = por %p100, %p101
      %p103 = scmp.ne.s32.totalorder %s95, %s97
      %p104 = scmp.eq.s32.totalorder %s24, 1
      %p105 = por %p103, %p104
      %p106 = scmp.ne.s32.totalorder %s97, %s98
      %p107 = scmp.eq.s32.totalorder %s24, 0
      %p108 = por %p106, %p107
      %p109 = scmp.ne.s32.totalorder %s97, %s98
      %p110 = scmp.eq.s32.totalorder %s25, 1
      %p111 = por %p109, %p110
      %p113 = scmp.ne.s32.totalorder %s98, %s112
      %p114 = scmp.eq.s32.totalorder %s25, 0
      %p115 = por %p113, %p114
      %s117 = sadd.s32 %s116, 1
      %p120 = scmp.eq.s32.totalorder %s19, 1
      %p121 = scmp.ne.s32.totalorder %s116, %s118
      %p122 = scmp.eq.s32.totalorder %s19, 0
      %p123 = por %p121, %p122
      %p124 = scmp.ne.s32.totalorder %s116, %s118
      %p125 = scmp.eq.s32.totalorder %s24, 1
      %p126 = por %p124, %p125
      %p127 = scmp.ne.s32.totalorder %s118, %s119
      %p128 = scmp.eq.s32.totalorder %s24, 0
      %p129 = por %p127, %p128
      %p130 = scmp.ne.s32.totalorder %s118, %s119
      %p131 = scmp.eq.s32.totalorder %s25, 1
      %p132 = por %p130, %p131
      %p134 = scmp.ne.s32.totalorder %s119, %s133
      %p135 = scmp.eq.s32.totalorder %s25, 0
      %p136 = por %p134, %p135
      %s138 = sadd.s32 %s137, 1
      %p141 = scmp.eq.s32.totalorder %s19, 1
      %p142 = scmp.ne.s32.totalorder %s137, %s139
      %p143 = scmp.eq.s32.totalorder %s19, 0
      %p144 = por %p142, %p143
      %p145 = scmp.ne.s32.totalorder %s137, %s139
      %p146 = scmp.eq.s32.totalorder %s24, 1
      %p147 = por %p145, %p146
      %p148 = scmp.ne.s32.totalorder %s139, %s140
      %p149 = scmp.eq.s32.totalorder %s24, 0
      %p150 = por %p148, %p149
      %p151 = scmp.ne.s32.totalorder %s139, %s140
      %p152 = scmp.eq.s32.totalorder %s25, 1
      %p153 = por %p151, %p152
      %p155 = scmp.ne.s32.totalorder %s140, %s154
      %p156 = scmp.eq.s32.totalorder %s25, 0
      %p157 = por %p155, %p156
      %s159 = sadd.s32 %s158, 1
      %p162 = scmp.eq.s32.totalorder %s19, 1
      %p163 = scmp.ne.s32.totalorder %s158, %s160
      %p164 = scmp.eq.s32.totalorder %s19, 0
      %p165 = por %p163, %p164
      %p166 = scmp.ne.s32.totalorder %s158, %s160
      %p167 = scmp.eq.s32.totalorder %s24, 1
      %p168 = por %p166, %p167
      %p169 = scmp.ne.s32.totalorder %s160, %s161
      %p170 = scmp.eq.s32.totalorder %s24, 0
      %p171 = por %p169, %p170
      %p172 = scmp.ne.s32.totalorder %s160, %s161
      %p173 = scmp.eq.s32.totalorder %s25, 1
      %p174 = por %p172, %p173
      %p176 = scmp.ne.s32.totalorder %s161, %s175
      %p177 = scmp.eq.s32.totalorder %s25, 0
      %p178 = por %p176, %p177
      %s180 = sadd.s32 %s179, 1
      %p183 = scmp.eq.s32.totalorder %s19, 1
      %p184 = scmp.ne.s32.totalorder %s179, %s181
      %p185 = scmp.eq.s32.totalorder %s19, 0
      %p186 = por %p184, %p185
      %p187 = scmp.ne.s32.totalorder %s179, %s181
      %p188 = scmp.eq.s32.totalorder %s24, 1
      %p189 = por %p187, %p188
      %p190 = scmp.ne.s32.totalorder %s181, %s182
      %p191 = scmp.eq.s32.totalorder %s24, 0
      %p192 = por %p190, %p191
      %p193 = scmp.ne.s32.totalorder %s181, %s182
      %p194 = scmp.eq.s32.totalorder %s25, 1
      %p195 = por %p193, %p194
      %p197 = scmp.ne.s32.totalorder %s182, %s196
      %p198 = scmp.eq.s32.totalorder %s25, 0
      %p199 = por %p197, %p198
      %s201 = sadd.s32 %s200, 1
      %p204 = scmp.eq.s32.totalorder %s19, 1
      %p205 = scmp.ne.s32.totalorder %s200, %s202
      %p206 = scmp.eq.s32.totalorder %s19, 0
      %p207 = por %p205, %p206
      %p208 = scmp.ne.s32.totalorder %s200, %s202
      %p209 = scmp.eq.s32.totalorder %s24, 1
      %p210 = por %p208, %p209
      %p211 = scmp.ne.s32.totalorder %s202, %s203
      %p212 = scmp.eq.s32.totalorder %s24, 0
      %p213 = por %p211, %p212
      %p214 = scmp.ne.s32.totalorder %s202, %s203
      %p215 = scmp.eq.s32.totalorder %s25, 1
      %p216 = por %p214, %p215
      %p218 = scmp.ne.s32.totalorder %s203, %s217
      %p219 = scmp.eq.s32.totalorder %s25, 0
      %p220 = por %p218, %p219
      %s222 = sadd.s32 %s221, 1
      %p225 = scmp.eq.s32.totalorder %s19, 1
      %p226 = scmp.ne.s32.totalorder %s221, %s223
      %p227 = scmp.eq.s32.totalorder %s19, 0
      %p228 = por %p226, %p227
      %p229 = scmp.ne.s32.totalorder %s221, %s223
      %p230 = scmp.eq.s32.totalorder %s24, 1
      %p231 = por %p229, %p230
      %p232 = scmp.ne.s32.totalorder %s223, %s224
      %p233 = scmp.eq.s32.totalorder %s24, 0
      %p234 = por %p232, %p233
      %p235 = scmp.ne.s32.totalorder %s223, %s224
      %p236 = scmp.eq.s32.totalorder %s25, 1
      %p237 = por %p235, %p236
      %p239 = scmp.ne.s32.totalorder %s224, %s238
      %p240 = scmp.eq.s32.totalorder %s25, 0
      %p241 = por %p239, %p240
      %s242 = ssub.s32 %s19, %s26
      %p243 = scmp.eq.s32.totalorder %s242, 0
      %s245 = sadd.s32 %s244, 1
      %s246 = scalar_select %p243, %s244, %s245
      %p249 = pneg %p243
      %p250 = scmp.eq.s32.totalorder %s19, 1
      %p251 = por %p249, %p250
      %p252 = scmp.ne.s32.totalorder %s244, %s247
      %p253 = scmp.eq.s32.totalorder %s19, 0
      %p254 = por %p252, %p253
      %p255 = scmp.ne.s32.totalorder %s244, %s247
      %p256 = scmp.eq.s32.totalorder %s24, 1
      %p257 = por %p255, %p256
      %p258 = scmp.ne.s32.totalorder %s247, %s248
      %p259 = scmp.eq.s32.totalorder %s24, 0
      %p260 = por %p258, %p259
      %p261 = scmp.ne.s32.totalorder %s247, %s248
      %p262 = scmp.eq.s32.totalorder %s25, 1
      %p263 = por %p261, %p262
      %p265 = scmp.ne.s32.totalorder %s248, %s264
      %p266 = scmp.eq.s32.totalorder %s25, 0
      %p267 = por %p265, %p266
      %p268 = scmp.le.s32.totalorder 1, %s19
      %p269 = scmp.lt.s32.totalorder %s19, 3
      %p270 = pnand %p268, %p269
      %p271 = pneg %p270
      // Predicated region
      $region9: #{tpu_custom_call.1} parent=5 // pred_check
        _
      $region10: #{tpu_custom_call.1} parent=5 // pred_check_branch
        %273 = sbr.rel (%p270) target = $region12
      $region11: #{tpu_custom_call.1} parent=5 // pred_region
        %s274 = ssub.s32 %s19, 1
        // Predicated region
        $region13: #{tpu_custom_call.1} parent=11 // pred_check
          %p275 = pneg %p66
        $region14: #{tpu_custom_call.1} parent=11 // pred_check_branch
          %277 = sbr.rel (%p275) target = $region16
        $region15: #{tpu_custom_call.1} parent=11 // pred_region
          _
        $region16: #{tpu_custom_call.1} parent=11 // pred_fallthru
          _
        // Predicated region
        $region17: #{tpu_custom_call.1} parent=11 // pred_check
          %p278 = pneg %p87
        $region18: #{tpu_custom_call.1} parent=11 // pred_check_branch
          %280 = sbr.rel (%p278) target = $region20
        $region19: #{tpu_custom_call.1} parent=11 // pred_region
          _
        $region20: #{tpu_custom_call.1} parent=11 // pred_fallthru
          _
        // Predicated region
        $region21: #{tpu_custom_call.1} parent=11 // pred_check
          %p281 = pneg %p108
        $region22: #{tpu_custom_call.1} parent=11 // pred_check_branch
          %283 = sbr.rel (%p281) target = $region24
        $region23: #{tpu_custom_call.1} parent=11 // pred_region
          _
        $region24: #{tpu_custom_call.1} parent=11 // pred_fallthru
          _
        // Predicated region
        $region25: #{tpu_custom_call.1} parent=11 // pred_check
          %p284 = pneg %p129
        $region26: #{tpu_custom_call.1} parent=11 // pred_check_branch
          %286 = sbr.rel (%p284) target = $region28
        $region27: #{tpu_custom_call.1} parent=11 // pred_region
          _
        $region28: #{tpu_custom_call.1} parent=11 // pred_fallthru
          _
        // Predicated region
        $region29: #{tpu_custom_call.1} parent=11 // pred_check
          %p287 = pneg %p150
        $region30: #{tpu_custom_call.1} parent=11 // pred_check_branch
          %289 = sbr.rel (%p287) target = $region32
        $region31: #{tpu_custom_call.1} parent=11 // pred_region
          _
        $region32: #{tpu_custom_call.1} parent=11 // pred_fallthru
          _
        // Predicated region
        $region33: #{tpu_custom_call.1} parent=11 // pred_check
          %p290 = pneg %p171
        $region34: #{tpu_custom_call.1} parent=11 // pred_check_branch
          %292 = sbr.rel (%p290) target = $region36
        $region35: #{tpu_custom_call.1} parent=11 // pred_region
          _
        $region36: #{tpu_custom_call.1} parent=11 // pred_fallthru
          _
        // Predicated region
        $region37: #{tpu_custom_call.1} parent=11 // pred_check
          %p293 = pneg %p192
        $region38: #{tpu_custom_call.1} parent=11 // pred_check_branch
          %295 = sbr.rel (%p293) target = $region40
        $region39: #{tpu_custom_call.1} parent=11 // pred_region
          _
        $region40: #{tpu_custom_call.1} parent=11 // pred_fallthru
          _
        // Predicated region
        $region41: #{tpu_custom_call.1} parent=11 // pred_check
          %p296 = pneg %p213
        $region42: #{tpu_custom_call.1} parent=11 // pred_check_branch
          %298 = sbr.rel (%p296) target = $region44
        $region43: #{tpu_custom_call.1} parent=11 // pred_region
          _
        $region44: #{tpu_custom_call.1} parent=11 // pred_fallthru
          _
        // Predicated region
        $region45: #{tpu_custom_call.1} parent=11 // pred_check
          %p299 = pneg %p234
        $region46: #{tpu_custom_call.1} parent=11 // pred_check_branch
          %301 = sbr.rel (%p299) target = $region48
        $region47: #{tpu_custom_call.1} parent=11 // pred_region
          _
        $region48: #{tpu_custom_call.1} parent=11 // pred_fallthru
          _
      $region12: #{tpu_custom_call.1} parent=5 // pred_fallthru
        _
      %p302 = scmp.lt.s32.totalorder %s19, 2
      // Predicated region
      $region49: #{tpu_custom_call.1} parent=5 // pred_check
        %p303 = pneg %p302
      $region50: #{tpu_custom_call.1} parent=5 // pred_check_branch
        %305 = sbr.rel (%p303) target = $region52
      $region51: #{tpu_custom_call.1} parent=5 // pred_region
        // Predicated region
        $region53: #{tpu_custom_call.1} parent=51 // pred_check
          %p306 = pneg %p39
        $region54: #{tpu_custom_call.1} parent=51 // pred_check_branch
          %308 = sbr.rel (%p306) target = $region56
        $region55: #{tpu_custom_call.1} parent=51 // pred_region
          %p309 = scmp.lt.s32.totalorder %s19, 1
          %s310 = scalar_select %p309, %s19, 1
          %s311 = smul.addr %s310, 4
          %s312 = smul.addr %s311, 4
          %s313 = scalar_lea.vmem %s0, %s312
        $region56: #{tpu_custom_call.1} parent=51 // pred_fallthru
          _
      $region52: #{tpu_custom_call.1} parent=5 // pred_fallthru
        _
      %p314 = scmp.le.s32.totalorder 1, %s19
      %p315 = scmp.lt.s32.totalorder %s19, 3
      %p316 = pnand %p314, %p315
      %p317 = pneg %p316
      // Predicated region
      $region57: #{tpu_custom_call.1} parent=5 // pred_check
        _
      $region58: #{tpu_custom_call.1} parent=5 // pred_check_branch
        %319 = sbr.rel (%p316) target = $region60
      $region59: #{tpu_custom_call.1} parent=5 // pred_region
        %s320 = ssub.s32 %s19, 1
        %p321 = scmp.lt.s32.totalorder %s24, 1
        %s322 = scalar_select %p321, %s24, 1
        %s323 = smul.addr %s322, 4
        %s324 = smul.addr %s323, 4
        %s325 = scalar_lea.vmem %s0, %s324
        %p326 = pneg %p45
        %p327 = pneg %p42
        %p328 = pneg %p66
        %p329 = pneg %p63
        %p330 = pneg %p87
        %p331 = pneg %p84
        %p332 = pneg %p108
        %p333 = pneg %p105
        %p334 = pneg %p129
        %p335 = pneg %p126
        %p336 = pneg %p150
        %p337 = pneg %p147
        %p338 = pneg %p171
        %p339 = pneg %p168
        %p340 = pneg %p192
        %p341 = pneg %p189
        %p342 = pneg %p213
        %p343 = pneg %p210
        %p344 = pneg %p234
        %p345 = pneg %p231
        %p346 = pneg %p260
        %p347 = pneg %p257
        %s348 = sand.u32 %s247, 1
        %s349 = scalar_lea.sflag [#allocation4], %s348
        %s350 = sand.u32 %s247, 1
        %s351 = smul.addr %s350, 32
        %s352 = scalar_lea.vmem [#allocation3], %s351
        %p353 = scmp.lt.s32.totalorder %s24, 1
        %s354 = scalar_select %p353, %s24, 1
        %s355 = smul.addr %s354, 4
        %s356 = smul.addr %s355, 4
        %s357 = scalar_lea.vmem %s0, %s356
        %v359 = vld [vmem:[%s1] sm:$0xf]
        %v360 = vld [vmem:[%s1 + $0x4] sm:$0xf]
        %v361 = vld [vmem:[%s1 + $0x8] sm:$0xf]
        %v362 = vld [vmem:[%s1 + $0xc] sm:$0xf]
        %v363 = vld [vmem:[%s1 + $0x10] sm:$0xf]
        %v364 = vld [vmem:[%s1 + $0x14] sm:$0xf]
        %v365 = vld [vmem:[%s357] sm:$0xff]
        %v366 = vld [vmem:[%s357 + $0x8] sm:$0xff]
        %v367 = vld [vmem:[%s2] sm:$0xff]
        %v368 = vld [vmem:[%s2 + $0x8] sm:$0xff]
        %v369 = vld [vmem:[%s2 + $0x10] sm:$0xff]
        %v370 = vld [vmem:[%s2 + $0x18] sm:$0xff]
        %v371 = vld [vmem:[%s2 + $0x20] sm:$0xff]
        %v372 = vld [vmem:[%s2 + $0x28] sm:$0xff]
        %374 = vset.pattern.permute.xlu0 0
        %375 = vperm.xlu0 %374, %v367
        %v376 = vpop.permute.xlu0 %375
        %379 = vset.pattern.permute.xlu0 0
        %380 = vperm.xlu0 %379, %v368
        %v381 = vpop.permute.xlu0 %380
        %384 = vset.pattern.permute.xlu0 0
        %385 = vperm.xlu0 %384, %v369
        %v386 = vpop.permute.xlu0 %385
        %389 = vset.pattern.permute.xlu0 0
        %390 = vperm.xlu0 %389, %v370
        %v391 = vpop.permute.xlu0 %390
        %394 = vset.pattern.permute.xlu0 0
        %395 = vperm.xlu0 %394, %v371
        %v396 = vpop.permute.xlu0 %395
        %399 = vset.pattern.permute.xlu0 0
        %400 = vperm.xlu0 %399, %v372
        %v401 = vpop.permute.xlu0 %400
        %v409 = vunpack.c.l.b16 %v359
        %v410 = vunpack.c.l.b16 %v360
        %v411 = vunpack.c.l.b16 %v361
        %v412 = vunpack.c.l.b16 %v362
        %v413 = vunpack.c.l.b16 %v363
        %v414 = vunpack.c.l.b16 %v364
        %v415 = vpack.c.b16 %v410, %v409
        %v416 = vpack.c.b16 %v412, %v411
        %v417 = vpack.c.b16 %v414, %v413
        %v420 = vunpack.c.l.b16 %v365
        %v421 = vunpack.c.h.b16 %v365
        %v422 = vunpack.c.l.b16 %v366
        %v423 = vunpack.c.h.b16 %v366
        %v424 = vpack.c.b16 %v422, %v420
        %v425 = vpack.c.b16 %v423, %v421
        %vm428 = vcmask 130048
        %v430 = vsel %vm428, %v415, 0
        %v433 = vsel %vm428, %v416, 0
        %v436 = vsel %vm428, %v417, 0
        %438 = vmatpush.bf16.msra.mxu0 0
        %439 = vmatpush.bf16.msra.mxu0 0
        %440 = vmatpush.bf16.msra.mxu0 0
        %441 = vmatpush.bf16.msra.mxu0 0
        %442 = vmatpush.bf16.msra.mxu0 0
        %443 = vmatpush.bf16.msra.mxu0 0
        %444 = vmatpush.bf16.msra.mxu0 0
        %445 = vmatpush.bf16.msra.mxu0 %v424
        %446 = vmatmul.bf16.gmra.mxu0 %v430
        %v447 = vpop.f32.mrf.mxu0
        %v448 = vadd.f32 %v376, %v447
        %v449 = vpop.f32.mrf.mxu0
        %v450 = vadd.f32 %v381, %v449
        %451 = vmatmul.bf16.gmra.mxu0 %v433
        %v452 = vpop.f32.mrf.mxu0
        %v453 = vadd.f32 %v386, %v452
        %v454 = vpop.f32.mrf.mxu0
        %v455 = vadd.f32 %v391, %v454
        %456 = vmatmul.bf16.gmra.mxu0 %v436
        %v457 = vpop.f32.mrf.mxu0
        %v458 = vadd.f32 %v396, %v457
        %v459 = vpop.f32.mrf.mxu0
        %v460 = vadd.f32 %v401, %v459
        %461 = vdwg.mxu0
        %462 = vmatpush.bf16.msra.mxu0 0
        %463 = vmatpush.bf16.msra.mxu0 0
        %464 = vmatpush.bf16.msra.mxu0 0
        %465 = vmatpush.bf16.msra.mxu0 0
        %466 = vmatpush.bf16.msra.mxu0 0
        %467 = vmatpush.bf16.msra.mxu0 0
        %468 = vmatpush.bf16.msra.mxu0 0
        %469 = vmatpush.bf16.msra.mxu0 %v425
        %470 = vmatmul.bf16.gmra.mxu0 %v430
        %v471 = vpop.f32.mrf.mxu0
        %v472 = vadd.f32 %v376, %v471
        %v473 = vpop.f32.mrf.mxu0
        %v474 = vadd.f32 %v381, %v473
        %475 = vmatmul.bf16.gmra.mxu0 %v433
        %v476 = vpop.f32.mrf.mxu0
        %v477 = vadd.f32 %v386, %v476
        %v478 = vpop.f32.mrf.mxu0
        %v479 = vadd.f32 %v391, %v478
        %480 = vmatmul.bf16.gmra.mxu0 %v436
        %v481 = vpop.f32.mrf.mxu0
        %v482 = vadd.f32 %v396, %v481
        %v483 = vpop.f32.mrf.mxu0
        %v484 = vadd.f32 %v401, %v483
        %485 = vdwg.mxu0
        %486 = vst [vmem:[#allocation2] sm:$0xff] 0.0
        %487 = vst [vmem:[#allocation2 + $0x20] sm:$0xff] 0.0
        %488 = vst [vmem:[#allocation2 + $0x40] sm:$0xff] 0.0
        %489 = vst [vmem:[#allocation2 + $0x60] sm:$0xff] 0.0
        %490 = vst [vmem:[#allocation2 + $0x80] sm:$0xff] 0.0
        %491 = vst [vmem:[#allocation2 + $0xa0] sm:$0xff] 0.0
        %492 = vst [vmem:[#allocation2 + $0x18] sm:$0xff] 0.0
        %493 = vst [vmem:[#allocation2 + $0x38] sm:$0xff] 0.0
        %494 = vst [vmem:[#allocation2 + $0x58] sm:$0xff] 0.0
        %495 = vst [vmem:[#allocation2 + $0x78] sm:$0xff] 0.0
        %496 = vst [vmem:[#allocation2 + $0x98] sm:$0xff] 0.0
        %497 = vst [vmem:[#allocation2 + $0xb8] sm:$0xff] 0.0
        %498 = vst [vmem:[#allocation2 + $0x8] sm:$0xff] %v448
        %499 = vst [vmem:[#allocation2 + $0x10] sm:$0xff] %v472
        %500 = vst [vmem:[#allocation2 + $0x28] sm:$0xff] %v450
        %501 = vst [vmem:[#allocation2 + $0x30] sm:$0xff] %v474
        %502 = vst [vmem:[#allocation2 + $0x48] sm:$0xff] %v453
        %503 = vst [vmem:[#allocation2 + $0x50] sm:$0xff] %v477
        %504 = vst [vmem:[#allocation2 + $0x68] sm:$0xff] %v455
        %505 = vst [vmem:[#allocation2 + $0x70] sm:$0xff] %v479
        %506 = vst [vmem:[#allocation2 + $0x88] sm:$0xff] %v458
        %507 = vst [vmem:[#allocation2 + $0x90] sm:$0xff] %v482
        %508 = vst [vmem:[#allocation2 + $0xa8] sm:$0xff] %v460
        %509 = vst [vmem:[#allocation2 + $0xb0] sm:$0xff] %v484
        %v510 = vld [vmem:[%s3] sm:$0xff]
        %v511 = vld [vmem:[%s3 + $0x8] sm:$0xff]
        %v512 = vld [vmem:[%s3 + $0x10] sm:$0xff]
        %v513 = vld [vmem:[%s3 + $0x18] sm:$0xff]
        %v514 = vld [vmem:[%s3 + $0x20] sm:$0xff]
        %v515 = vld [vmem:[%s3 + $0x28] sm:$0xff]
        %v516 = vld [vmem:[%s5] ss:$2 sm:$0x3]
        %s517 = scalar_lea.vmem %s5, 1
        %v518 = vld [vmem:[%s517] ss:$2 sm:$0x3]
        %v519 = vld [vmem:[#allocation2] sm:$0xff]
        %v520 = vld [vmem:[#allocation2 + $0x8] sm:$0xff]
        %v521 = vld [vmem:[#allocation2 + $0x10] sm:$0xff]
        %v522 = vld [vmem:[#allocation2 + $0x20] sm:$0xff]
        %v523 = vld [vmem:[#allocation2 + $0x28] sm:$0xff]
        %v524 = vld [vmem:[#allocation2 + $0x30] sm:$0xff]
        %v525 = vld [vmem:[#allocation2 + $0x40] sm:$0xff]
        %v526 = vld [vmem:[#allocation2 + $0x48] sm:$0xff]
        %v527 = vld [vmem:[#allocation2 + $0x50] sm:$0xff]
        %v528 = vld [vmem:[#allocation2 + $0x60] sm:$0xff]
        %v529 = vld [vmem:[#allocation2 + $0x68] sm:$0xff]
        %v530 = vld [vmem:[#allocation2 + $0x70] sm:$0xff]
        %v531 = vld [vmem:[#allocation2 + $0x80] sm:$0xff]
        %v532 = vld [vmem:[#allocation2 + $0x88] sm:$0xff]
        %v533 = vld [vmem:[#allocation2 + $0x90] sm:$0xff]
        %v534 = vld [vmem:[#allocation2 + $0xa0] sm:$0xff]
        %v535 = vld [vmem:[#allocation2 + $0xa8] sm:$0xff]
        %v536 = vld [vmem:[#allocation2 + $0xb0] sm:$0xff]
        %v538 = vperm.slane %v516, 0
        %v539 = vperm.slane %v516, 1
        %540 = vrot.lane.b32.xlu0 %v538, 111
        %v541 = vpop.permute.xlu0 %540
        %542 = vrot.lane.b32.xlu0 %v539, 111
        %v543 = vpop.permute.xlu0 %542
        %vm544 = vcmask 908288
        %v545 = vsel %vm544, %v541, %v543
        %v549 = vmul.f32 %v519, %v541
        %v550 = vmul.f32 %v520, %v545
        %v551 = vmul.f32 %v521, %v543
        %v552 = vmul.f32 %v522, %v541
        %v553 = vmul.f32 %v523, %v545
        %v554 = vmul.f32 %v524, %v543
        %v555 = vmul.f32 %v525, %v541
        %v556 = vmul.f32 %v526, %v545
        %v557 = vmul.f32 %v527, %v543
        %v558 = vmul.f32 %v528, %v541
        %v559 = vmul.f32 %v529, %v545
        %v560 = vmul.f32 %v530, %v543
        %v561 = vmul.f32 %v531, %v541
        %v562 = vmul.f32 %v532, %v545
        %v563 = vmul.f32 %v533, %v543
        %v564 = vmul.f32 %v534, %v541
        %v565 = vmul.f32 %v535, %v545
        %v566 = vmul.f32 %v536, %v543
        %568 = vset.pattern.permute.xlu0 0
        %569 = vperm.xlu0 %568, %v510
        %v570 = vpop.permute.xlu0 %569
        %573 = vset.pattern.permute.xlu0 0
        %574 = vperm.xlu0 %573, %v511
        %v575 = vpop.permute.xlu0 %574
        %578 = vset.pattern.permute.xlu0 0
        %579 = vperm.xlu0 %578, %v512
        %v580 = vpop.permute.xlu0 %579
        %583 = vset.pattern.permute.xlu0 0
        %584 = vperm.xlu0 %583, %v513
        %v585 = vpop.permute.xlu0 %584
        %588 = vset.pattern.permute.xlu0 0
        %589 = vperm.xlu0 %588, %v514
        %v590 = vpop.permute.xlu0 %589
        %593 = vset.pattern.permute.xlu0 0
        %594 = vperm.xlu0 %593, %v515
        %v595 = vpop.permute.xlu0 %594
        %v597 = vmul.f32 %v549, %v570
        %v598 = vmul.f32 %v550, %v570
        %v599 = vmul.f32 %v551, %v570
        %v600 = vmul.f32 %v552, %v575
        %v601 = vmul.f32 %v553, %v575
        %v602 = vmul.f32 %v554, %v575
        %v603 = vmul.f32 %v555, %v580
        %v604 = vmul.f32 %v556, %v580
        %v605 = vmul.f32 %v557, %v580
        %v606 = vmul.f32 %v558, %v585
        %v607 = vmul.f32 %v559, %v585
        %v608 = vmul.f32 %v560, %v585
        %v609 = vmul.f32 %v561, %v590
        %v610 = vmul.f32 %v562, %v590
        %v611 = vmul.f32 %v563, %v590
        %v612 = vmul.f32 %v564, %v595
        %v613 = vmul.f32 %v565, %v595
        %v614 = vmul.f32 %v566, %v595
        %v615 = vadd.f32 %v597, 0.0
        %v616 = vadd.f32 %v598, 0.0
        %v617 = vadd.f32 %v599, 0.0
        %v618 = vadd.f32 %v600, 0.0
        %v619 = vadd.f32 %v601, 0.0
        %v620 = vadd.f32 %v602, 0.0
        %v621 = vadd.f32 %v603, 0.0
        %v622 = vadd.f32 %v604, 0.0
        %v623 = vadd.f32 %v605, 0.0
        %v624 = vadd.f32 %v606, 0.0
        %v625 = vadd.f32 %v607, 0.0
        %v626 = vadd.f32 %v608, 0.0
        %v627 = vadd.f32 %v609, 0.0
        %v628 = vadd.f32 %v610, 0.0
        %v629 = vadd.f32 %v611, 0.0
        %v630 = vadd.f32 %v612, 0.0
        %v631 = vadd.f32 %v613, 0.0
        %v632 = vadd.f32 %v614, 0.0
        %633 = vset.pattern.permute.xlu0 1
        %634 = vperm.xlu0 %633, %v510
        %v635 = vpop.permute.xlu0 %634
        %637 = vset.pattern.permute.xlu0 1
        %638 = vperm.xlu0 %637, %v511
        %v639 = vpop.permute.xlu0 %638
        %641 = vset.pattern.permute.xlu0 1
        %642 = vperm.xlu0 %641, %v512
        %v643 = vpop.permute.xlu0 %642
        %645 = vset.pattern.permute.xlu0 1
        %646 = vperm.xlu0 %645, %v513
        %v647 = vpop.permute.xlu0 %646
        %649 = vset.pattern.permute.xlu0 1
        %650 = vperm.xlu0 %649, %v514
        %v651 = vpop.permute.xlu0 %650
        %653 = vset.pattern.permute.xlu0 1
        %654 = vperm.xlu0 %653, %v515
        %v655 = vpop.permute.xlu0 %654
        %v657 = vmul.f32 %v519, %v635
        %v658 = vmul.f32 %v520, %v635
        %v659 = vmul.f32 %v521, %v635
        %v660 = vmul.f32 %v522, %v639
        %v661 = vmul.f32 %v523, %v639
        %v662 = vmul.f32 %v524, %v639
        %v663 = vmul.f32 %v525, %v643
        %v664 = vmul.f32 %v526, %v643
        %v665 = vmul.f32 %v527, %v643
        %v666 = vmul.f32 %v528, %v647
        %v667 = vmul.f32 %v529, %v647
        %v668 = vmul.f32 %v530, %v647
        %v669 = vmul.f32 %v531, %v651
        %v670 = vmul.f32 %v532, %v651
        %v671 = vmul.f32 %v533, %v651
        %v672 = vmul.f32 %v534, %v655
        %v673 = vmul.f32 %v535, %v655
        %v674 = vmul.f32 %v536, %v655
        %693 = vrot.lane.b32.xlu0 %v657, 127
        %v694 = vpop.permute.xlu0 %693
        %695 = vrot.lane.b32.xlu0 %v658, 127
        %v696 = vpop.permute.xlu0 %695
        %697 = vrot.lane.b32.xlu0 %v659, 127
        %v698 = vpop.permute.xlu0 %697
        %699 = vrot.lane.b32.xlu0 %v660, 127
        %v700 = vpop.permute.xlu0 %699
        %701 = vrot.lane.b32.xlu0 %v661, 127
        %v702 = vpop.permute.xlu0 %701
        %703 = vrot.lane.b32.xlu0 %v662, 127
        %v704 = vpop.permute.xlu0 %703
        %705 = vrot.lane.b32.xlu0 %v663, 127
        %v706 = vpop.permute.xlu0 %705
        %707 = vrot.lane.b32.xlu0 %v664, 127
        %v708 = vpop.permute.xlu0 %707
        %709 = vrot.lane.b32.xlu0 %v665, 127
        %v710 = vpop.permute.xlu0 %709
        %711 = vrot.lane.b32.xlu0 %v666, 127
        %v712 = vpop.permute.xlu0 %711
        %713 = vrot.lane.b32.xlu0 %v667, 127
        %v714 = vpop.permute.xlu0 %713
        %715 = vrot.lane.b32.xlu0 %v668, 127
        %v716 = vpop.permute.xlu0 %715
        %717 = vrot.lane.b32.xlu0 %v669, 127
        %v718 = vpop.permute.xlu0 %717
        %719 = vrot.lane.b32.xlu0 %v670, 127
        %v720 = vpop.permute.xlu0 %719
        %721 = vrot.lane.b32.xlu0 %v671, 127
        %v722 = vpop.permute.xlu0 %721
        %723 = vrot.lane.b32.xlu0 %v672, 127
        %v724 = vpop.permute.xlu0 %723
        %725 = vrot.lane.b32.xlu0 %v673, 127
        %v726 = vpop.permute.xlu0 %725
        %727 = vrot.lane.b32.xlu0 %v674, 127
        %v728 = vpop.permute.xlu0 %727
        %vm729 = vcmask 1039360
        %v730 = vsel %vm729, %v694, %v696
        %v731 = vsel %vm729, %v696, %v698
        %v732 = vsel %vm729, %v700, %v702
        %v733 = vsel %vm729, %v702, %v704
        %v734 = vsel %vm729, %v706, %v708
        %v735 = vsel %vm729, %v708, %v710
        %v736 = vsel %vm729, %v712, %v714
        %v737 = vsel %vm729, %v714, %v716
        %v738 = vsel %vm729, %v718, %v720
        %v739 = vsel %vm729, %v720, %v722
        %v740 = vsel %vm729, %v724, %v726
        %v741 = vsel %vm729, %v726, %v728
        %v760 = vadd.f32 %v615, %v730
        %v761 = vadd.f32 %v616, %v731
        %v762 = vadd.f32 %v617, %v698
        %v763 = vadd.f32 %v618, %v732
        %v764 = vadd.f32 %v619, %v733
        %v765 = vadd.f32 %v620, %v704
        %v766 = vadd.f32 %v621, %v734
        %v767 = vadd.f32 %v622, %v735
        %v768 = vadd.f32 %v623, %v710
        %v769 = vadd.f32 %v624, %v736
        %v770 = vadd.f32 %v625, %v737
        %v771 = vadd.f32 %v626, %v716
        %v772 = vadd.f32 %v627, %v738
        %v773 = vadd.f32 %v628, %v739
        %v774 = vadd.f32 %v629, %v722
        %v775 = vadd.f32 %v630, %v740
        %v776 = vadd.f32 %v631, %v741
        %v777 = vadd.f32 %v632, %v728
        %v779 = vperm.slane %v518, 0
        %v780 = vperm.slane %v518, 1
        %781 = vrot.lane.b32.xlu0 %v779, 113
        %v782 = vpop.permute.xlu0 %781
        %783 = vrot.lane.b32.xlu0 %v780, 113
        %v784 = vpop.permute.xlu0 %783
        %vm785 = vcmask 924672
        %v786 = vsel %vm785, %v782, %v784
        %v790 = vmul.f32 %v519, %v782
        %v791 = vmul.f32 %v520, %v786
        %v792 = vmul.f32 %v521, %v784
        %v793 = vmul.f32 %v522, %v782
        %v794 = vmul.f32 %v523, %v786
        %v795 = vmul.f32 %v524, %v784
        %v796 = vmul.f32 %v525, %v782
        %v797 = vmul.f32 %v526, %v786
        %v798 = vmul.f32 %v527, %v784
        %v799 = vmul.f32 %v528, %v782
        %v800 = vmul.f32 %v529, %v786
        %v801 = vmul.f32 %v530, %v784
        %v802 = vmul.f32 %v531, %v782
        %v803 = vmul.f32 %v532, %v786
        %v804 = vmul.f32 %v533, %v784
        %v805 = vmul.f32 %v534, %v782
        %v806 = vmul.f32 %v535, %v786
        %v807 = vmul.f32 %v536, %v784
        %808 = vset.pattern.permute.xlu0 2
        %809 = vperm.xlu0 %808, %v510
        %v810 = vpop.permute.xlu0 %809
        %812 = vset.pattern.permute.xlu0 2
        %813 = vperm.xlu0 %812, %v511
        %v814 = vpop.permute.xlu0 %813
        %816 = vset.pattern.permute.xlu0 2
        %817 = vperm.xlu0 %816, %v512
        %v818 = vpop.permute.xlu0 %817
        %820 = vset.pattern.permute.xlu0 2
        %821 = vperm.xlu0 %820, %v513
        %v822 = vpop.permute.xlu0 %821
        %824 = vset.pattern.permute.xlu0 2
        %825 = vperm.xlu0 %824, %v514
        %v826 = vpop.permute.xlu0 %825
        %828 = vset.pattern.permute.xlu0 2
        %829 = vperm.xlu0 %828, %v515
        %v830 = vpop.permute.xlu0 %829
        %v832 = vmul.f32 %v790, %v810
        %v833 = vmul.f32 %v791, %v810
        %v834 = vmul.f32 %v792, %v810
        %v835 = vmul.f32 %v793, %v814
        %v836 = vmul.f32 %v794, %v814
        %v837 = vmul.f32 %v795, %v814
        %v838 = vmul.f32 %v796, %v818
        %v839 = vmul.f32 %v797, %v818
        %v840 = vmul.f32 %v798, %v818
        %v841 = vmul.f32 %v799, %v822
        %v842 = vmul.f32 %v800, %v822
        %v843 = vmul.f32 %v801, %v822
        %v844 = vmul.f32 %v802, %v826
        %v845 = vmul.f32 %v803, %v826
        %v846 = vmul.f32 %v804, %v826
        %v847 = vmul.f32 %v805, %v830
        %v848 = vmul.f32 %v806, %v830
        %v849 = vmul.f32 %v807, %v830
        %868 = vrot.lane.b32.xlu0 %v832, 126
        %v869 = vpop.permute.xlu0 %868
        %870 = vrot.lane.b32.xlu0 %v833, 126
        %v871 = vpop.permute.xlu0 %870
        %872 = vrot.lane.b32.xlu0 %v834, 126
        %v873 = vpop.permute.xlu0 %872
        %874 = vrot.lane.b32.xlu0 %v835, 126
        %v875 = vpop.permute.xlu0 %874
        %876 = vrot.lane.b32.xlu0 %v836, 126
        %v877 = vpop.permute.xlu0 %876
        %878 = vrot.lane.b32.xlu0 %v837, 126
        %v879 = vpop.permute.xlu0 %878
        %880 = vrot.lane.b32.xlu0 %v838, 126
        %v881 = vpop.permute.xlu0 %880
        %882 = vrot.lane.b32.xlu0 %v839, 126
        %v883 = vpop.permute.xlu0 %882
        %884 = vrot.lane.b32.xlu0 %v840, 126
        %v885 = vpop.permute.xlu0 %884
        %886 = vrot.lane.b32.xlu0 %v841, 126
        %v887 = vpop.permute.xlu0 %886
        %888 = vrot.lane.b32.xlu0 %v842, 126
        %v889 = vpop.permute.xlu0 %888
        %890 = vrot.lane.b32.xlu0 %v843, 126
        %v891 = vpop.permute.xlu0 %890
        %892 = vrot.lane.b32.xlu0 %v844, 126
        %v893 = vpop.permute.xlu0 %892
        %894 = vrot.lane.b32.xlu0 %v845, 126
        %v895 = vpop.permute.xlu0 %894
        %896 = vrot.lane.b32.xlu0 %v846, 126
        %v897 = vpop.permute.xlu0 %896
        %898 = vrot.lane.b32.xlu0 %v847, 126
        %v899 = vpop.permute.xlu0 %898
        %900 = vrot.lane.b32.xlu0 %v848, 126
        %v901 = vpop.permute.xlu0 %900
        %902 = vrot.lane.b32.xlu0 %v849, 126
        %v903 = vpop.permute.xlu0 %902
        %vm904 = vcmask 1031168
        %v905 = vsel %vm904, %v869, %v871
        %v906 = vsel %vm904, %v871, %v873
        %v907 = vsel %vm904, %v875, %v877
        %v908 = vsel %vm904, %v877, %v879
        %v909 = vsel %vm904, %v881, %v883
        %v910 = vsel %vm904, %v883, %v885
        %v911 = vsel %vm904, %v887, %v889
        %v912 = vsel %vm904, %v889, %v891
        %v913 = vsel %vm904, %v893, %v895
        %v914 = vsel %vm904, %v895, %v897
        %v915 = vsel %vm904, %v899, %v901
        %v916 = vsel %vm904, %v901, %v903
        %v935 = vadd.f32 %v760, %v905
        %v936 = vadd.f32 %v761, %v906
        %v937 = vadd.f32 %v762, %v873
        %v938 = vadd.f32 %v763, %v907
        %v939 = vadd.f32 %v764, %v908
        %v940 = vadd.f32 %v765, %v879
        %v941 = vadd.f32 %v766, %v909
        %v942 = vadd.f32 %v767, %v910
        %v943 = vadd.f32 %v768, %v885
        %v944 = vadd.f32 %v769, %v911
        %v945 = vadd.f32 %v770, %v912
        %v946 = vadd.f32 %v771, %v891
        %v947 = vadd.f32 %v772, %v913
        %v948 = vadd.f32 %v773, %v914
        %v949 = vadd.f32 %v774, %v897
        %v950 = vadd.f32 %v775, %v915
        %v951 = vadd.f32 %v776, %v916
        %v952 = vadd.f32 %v777, %v903
        %953 = vrot.lane.b32.xlu0 %v538, 127
        %v954 = vpop.permute.xlu0 %953
        %955 = vrot.lane.b32.xlu0 %v539, 127
        %v956 = vpop.permute.xlu0 %955
        %v957 = vsel %vm729, %v954, %v956
        %v961 = vmul.f32 %v519, %v954
        %v962 = vmul.f32 %v520, %v957
        %v963 = vmul.f32 %v521, %v956
        %v964 = vmul.f32 %v522, %v954
        %v965 = vmul.f32 %v523, %v957
        %v966 = vmul.f32 %v524, %v956
        %v967 = vmul.f32 %v525, %v954
        %v968 = vmul.f32 %v526, %v957
        %v969 = vmul.f32 %v527, %v956
        %v970 = vmul.f32 %v528, %v954
        %v971 = vmul.f32 %v529, %v957
        %v972 = vmul.f32 %v530, %v956
        %v973 = vmul.f32 %v531, %v954
        %v974 = vmul.f32 %v532, %v957
        %v975 = vmul.f32 %v533, %v956
        %v976 = vmul.f32 %v534, %v954
        %v977 = vmul.f32 %v535, %v957
        %v978 = vmul.f32 %v536, %v956
        %979 = vset.pattern.permute.xlu0 3
        %980 = vperm.xlu0 %979, %v510
        %v981 = vpop.permute.xlu0 %980
        %983 = vset.pattern.permute.xlu0 3
        %984 = vperm.xlu0 %983, %v511
        %v985 = vpop.permute.xlu0 %984
        %987 = vset.pattern.permute.xlu0 3
        %988 = vperm.xlu0 %987, %v512
        %v989 = vpop.permute.xlu0 %988
        %991 = vset.pattern.permute.xlu0 3
        %992 = vperm.xlu0 %991, %v513
        %v993 = vpop.permute.xlu0 %992
        %995 = vset.pattern.permute.xlu0 3
        %996 = vperm.xlu0 %995, %v514
        %v997 = vpop.permute.xlu0 %996
        %999 = vset.pattern.permute.xlu0 3
        %1000 = vperm.xlu0 %999, %v515
        %v1001 = vpop.permute.xlu0 %1000
        %v1003 = vmul.f32 %v961, %v981
        %v1004 = vmul.f32 %v962, %v981
        %v1005 = vmul.f32 %v963, %v981
        %v1006 = vmul.f32 %v964, %v985
        %v1007 = vmul.f32 %v965, %v985
        %v1008 = vmul.f32 %v966, %v985
        %v1009 = vmul.f32 %v967, %v989
        %v1010 = vmul.f32 %v968, %v989
        %v1011 = vmul.f32 %v969, %v989
        %v1012 = vmul.f32 %v970, %v993
        %v1013 = vmul.f32 %v971, %v993
        %v1014 = vmul.f32 %v972, %v993
        %v1015 = vmul.f32 %v973, %v997
        %v1016 = vmul.f32 %v974, %v997
        %v1017 = vmul.f32 %v975, %v997
        %v1018 = vmul.f32 %v976, %v1001
        %v1019 = vmul.f32 %v977, %v1001
        %v1020 = vmul.f32 %v978, %v1001
        %1039 = vrot.lane.b32.xlu0 %v1003, 112
        %v1040 = vpop.permute.xlu0 %1039
        %1041 = vrot.lane.b32.xlu0 %v1004, 112
        %v1042 = vpop.permute.xlu0 %1041
        %1043 = vrot.lane.b32.xlu0 %v1005, 112
        %v1044 = vpop.permute.xlu0 %1043
        %1045 = vrot.lane.b32.xlu0 %v1006, 112
        %v1046 = vpop.permute.xlu0 %1045
        %1047 = vrot.lane.b32.xlu0 %v1007, 112
        %v1048 = vpop.permute.xlu0 %1047
        %1049 = vrot.lane.b32.xlu0 %v1008, 112
        %v1050 = vpop.permute.xlu0 %1049
        %1051 = vrot.lane.b32.xlu0 %v1009, 112
        %v1052 = vpop.permute.xlu0 %1051
        %1053 = vrot.lane.b32.xlu0 %v1010, 112
        %v1054 = vpop.permute.xlu0 %1053
        %1055 = vrot.lane.b32.xlu0 %v1011, 112
        %v1056 = vpop.permute.xlu0 %1055
        %1057 = vrot.lane.b32.xlu0 %v1012, 112
        %v1058 = vpop.permute.xlu0 %1057
        %1059 = vrot.lane.b32.xlu0 %v1013, 112
        %v1060 = vpop.permute.xlu0 %1059
        %1061 = vrot.lane.b32.xlu0 %v1014, 112
        %v1062 = vpop.permute.xlu0 %1061
        %1063 = vrot.lane.b32.xlu0 %v1015, 112
        %v1064 = vpop.permute.xlu0 %1063
        %1065 = vrot.lane.b32.xlu0 %v1016, 112
        %v1066 = vpop.permute.xlu0 %1065
        %1067 = vrot.lane.b32.xlu0 %v1017, 112
        %v1068 = vpop.permute.xlu0 %1067
        %1069 = vrot.lane.b32.xlu0 %v1018, 112
        %v1070 = vpop.permute.xlu0 %1069
        %1071 = vrot.lane.b32.xlu0 %v1019, 112
        %v1072 = vpop.permute.xlu0 %1071
        %1073 = vrot.lane.b32.xlu0 %v1020, 112
        %v1074 = vpop.permute.xlu0 %1073
        %vm1075 = vcmask 916480
        %v1076 = vsel %vm1075, %v1040, %v1042
        %v1077 = vsel %vm1075, %v1042, %v1044
        %v1078 = vsel %vm1075, %v1046, %v1048
        %v1079 = vsel %vm1075, %v1048, %v1050
        %v1080 = vsel %vm1075, %v1052, %v1054
        %v1081 = vsel %vm1075, %v1054, %v1056
        %v1082 = vsel %vm1075, %v1058, %v1060
        %v1083 = vsel %vm1075, %v1060, %v1062
        %v1084 = vsel %vm1075, %v1064, %v1066
        %v1085 = vsel %vm1075, %v1066, %v1068
        %v1086 = vsel %vm1075, %v1070, %v1072
        %v1087 = vsel %vm1075, %v1072, %v1074
        %v1106 = vadd.f32 %v935, %v1076
        %v1107 = vadd.f32 %v936, %v1077
        %v1108 = vadd.f32 %v937, %v1044
        %v1109 = vadd.f32 %v938, %v1078
        %v1110 = vadd.f32 %v939, %v1079
        %v1111 = vadd.f32 %v940, %v1050
        %v1112 = vadd.f32 %v941, %v1080
        %v1113 = vadd.f32 %v942, %v1081
        %v1114 = vadd.f32 %v943, %v1056
        %v1115 = vadd.f32 %v944, %v1082
        %v1116 = vadd.f32 %v945, %v1083
        %v1117 = vadd.f32 %v946, %v1062
        %v1118 = vadd.f32 %v947, %v1084
        %v1119 = vadd.f32 %v948, %v1085
        %v1120 = vadd.f32 %v949, %v1068
        %v1121 = vadd.f32 %v950, %v1086
        %v1122 = vadd.f32 %v951, %v1087
        %v1123 = vadd.f32 %v952, %v1074
        %1124 = vset.pattern.permute.xlu0 4
        %1125 = vperm.xlu0 %1124, %v510
        %v1126 = vpop.permute.xlu0 %1125
        %1128 = vset.pattern.permute.xlu0 4
        %1129 = vperm.xlu0 %1128, %v511
        %v1130 = vpop.permute.xlu0 %1129
        %1132 = vset.pattern.permute.xlu0 4
        %1133 = vperm.xlu0 %1132, %v512
        %v1134 = vpop.permute.xlu0 %1133
        %1136 = vset.pattern.permute.xlu0 4
        %1137 = vperm.xlu0 %1136, %v513
        %v1138 = vpop.permute.xlu0 %1137
        %1140 = vset.pattern.permute.xlu0 4
        %1141 = vperm.xlu0 %1140, %v514
        %v1142 = vpop.permute.xlu0 %1141
        %1144 = vset.pattern.permute.xlu0 4
        %1145 = vperm.xlu0 %1144, %v515
        %v1146 = vpop.permute.xlu0 %1145
        %v1148 = vmul.f32 %v520, %v1126
        %v1149 = vmul.f32 %v521, %v1126
        %v1150 = vmul.f32 %v523, %v1130
        %v1151 = vmul.f32 %v524, %v1130
        %v1152 = vmul.f32 %v526, %v1134
        %v1153 = vmul.f32 %v527, %v1134
        %v1154 = vmul.f32 %v529, %v1138
        %v1155 = vmul.f32 %v530, %v1138
        %v1156 = vmul.f32 %v532, %v1142
        %v1157 = vmul.f32 %v533, %v1142
        %v1158 = vmul.f32 %v535, %v1146
        %v1159 = vmul.f32 %v536, %v1146
        %1172 = vrot.lane.b32.xlu0 %v1148, 111
        %v1173 = vpop.permute.xlu0 %1172
        %1174 = vrot.lane.b32.xlu0 %v1149, 111
        %v1175 = vpop.permute.xlu0 %1174
        %1176 = vrot.lane.b32.xlu0 %v1150, 111
        %v1177 = vpop.permute.xlu0 %1176
        %1178 = vrot.lane.b32.xlu0 %v1151, 111
        %v1179 = vpop.permute.xlu0 %1178
        %1180 = vrot.lane.b32.xlu0 %v1152, 111
        %v1181 = vpop.permute.xlu0 %1180
        %1182 = vrot.lane.b32.xlu0 %v1153, 111
        %v1183 = vpop.permute.xlu0 %1182
        %1184 = vrot.lane.b32.xlu0 %v1154, 111
        %v1185 = vpop.permute.xlu0 %1184
        %1186 = vrot.lane.b32.xlu0 %v1155, 111
        %v1187 = vpop.permute.xlu0 %1186
        %1188 = vrot.lane.b32.xlu0 %v1156, 111
        %v1189 = vpop.permute.xlu0 %1188
        %1190 = vrot.lane.b32.xlu0 %v1157, 111
        %v1191 = vpop.permute.xlu0 %1190
        %1192 = vrot.lane.b32.xlu0 %v1158, 111
        %v1193 = vpop.permute.xlu0 %1192
        %1194 = vrot.lane.b32.xlu0 %v1159, 111
        %v1195 = vpop.permute.xlu0 %1194
        %v1196 = vsel %vm544, %v1173, %v1175
        %v1197 = vsel %vm544, %v1177, %v1179
        %v1198 = vsel %vm544, %v1181, %v1183
        %v1199 = vsel %vm544, %v1185, %v1187
        %v1200 = vsel %vm544, %v1189, %v1191
        %v1201 = vsel %vm544, %v1193, %v1195
        %v1220 = vadd.f32 %v1106, %v1173
        %v1221 = vadd.f32 %v1107, %v1196
        %v1222 = vadd.f32 %v1108, %v1175
        %v1223 = vadd.f32 %v1109, %v1177
        %v1224 = vadd.f32 %v1110, %v1197
        %v1225 = vadd.f32 %v1111, %v1179
        %v1226 = vadd.f32 %v1112, %v1181
        %v1227 = vadd.f32 %v1113, %v1198
        %v1228 = vadd.f32 %v1114, %v1183
        %v1229 = vadd.f32 %v1115, %v1185
        %v1230 = vadd.f32 %v1116, %v1199
        %v1231 = vadd.f32 %v1117, %v1187
        %v1232 = vadd.f32 %v1118, %v1189
        %v1233 = vadd.f32 %v1119, %v1200
        %v1234 = vadd.f32 %v1120, %v1191
        %v1235 = vadd.f32 %v1121, %v1193
        %v1236 = vadd.f32 %v1122, %v1201
        %v1237 = vadd.f32 %v1123, %v1195
        %v1238 = vld [vmem:[#allocation2 + $0x8] sm:$0xff]
        %v1239 = vld [vmem:[#allocation2 + $0x10] sm:$0xff]
        %v1240 = vld [vmem:[#allocation2 + $0x18] sm:$0xff]
        %v1241 = vld [vmem:[#allocation2 + $0x28] sm:$0xff]
        %v1242 = vld [vmem:[#allocation2 + $0x30] sm:$0xff]
        %v1243 = vld [vmem:[#allocation2 + $0x38] sm:$0xff]
        %v1244 = vld [vmem:[#allocation2 + $0x48] sm:$0xff]
        %v1245 = vld [vmem:[#allocation2 + $0x50] sm:$0xff]
        %v1246 = vld [vmem:[#allocation2 + $0x58] sm:$0xff]
        %v1247 = vld [vmem:[#allocation2 + $0x68] sm:$0xff]
        %v1248 = vld [vmem:[#allocation2 + $0x70] sm:$0xff]
        %v1249 = vld [vmem:[#allocation2 + $0x78] sm:$0xff]
        %v1250 = vld [vmem:[#allocation2 + $0x88] sm:$0xff]
        %v1251 = vld [vmem:[#allocation2 + $0x90] sm:$0xff]
        %v1252 = vld [vmem:[#allocation2 + $0x98] sm:$0xff]
        %v1253 = vld [vmem:[#allocation2 + $0xa8] sm:$0xff]
        %v1254 = vld [vmem:[#allocation2 + $0xb0] sm:$0xff]
        %v1255 = vld [vmem:[#allocation2 + $0xb8] sm:$0xff]
        %1256 = vrot.lane.b32.xlu0 %v779, 1
        %v1257 = vpop.permute.xlu0 %1256
        %1258 = vrot.lane.b32.xlu0 %v780, 1
        %v1259 = vpop.permute.xlu0 %1258
        %vm1260 = vcmask 7168
        %v1261 = vsel %vm1260, %v1257, %v1259
        %v1265 = vmul.f32 %v1238, %v1257
        %v1266 = vmul.f32 %v1239, %v1261
        %v1267 = vmul.f32 %v1240, %v1259
        %v1268 = vmul.f32 %v1241, %v1257
        %v1269 = vmul.f32 %v1242, %v1261
        %v1270 = vmul.f32 %v1243, %v1259
        %v1271 = vmul.f32 %v1244, %v1257
        %v1272 = vmul.f32 %v1245, %v1261
        %v1273 = vmul.f32 %v1246, %v1259
        %v1274 = vmul.f32 %v1247, %v1257
        %v1275 = vmul.f32 %v1248, %v1261
        %v1276 = vmul.f32 %v1249, %v1259
        %v1277 = vmul.f32 %v1250, %v1257
        %v1278 = vmul.f32 %v1251, %v1261
        %v1279 = vmul.f32 %v1252, %v1259
        %v1280 = vmul.f32 %v1253, %v1257
        %v1281 = vmul.f32 %v1254, %v1261
        %v1282 = vmul.f32 %v1255, %v1259
        %1283 = vset.pattern.permute.xlu0 5
        %1284 = vperm.xlu0 %1283, %v510
        %v1285 = vpop.permute.xlu0 %1284
        %1287 = vset.pattern.permute.xlu0 5
        %1288 = vperm.xlu0 %1287, %v511
        %v1289 = vpop.permute.xlu0 %1288
        %1291 = vset.pattern.permute.xlu0 5
        %1292 = vperm.xlu0 %1291, %v512
        %v1293 = vpop.permute.xlu0 %1292
        %1295 = vset.pattern.permute.xlu0 5
        %1296 = vperm.xlu0 %1295, %v513
        %v1297 = vpop.permute.xlu0 %1296
        %1299 = vset.pattern.permute.xlu0 5
        %1300 = vperm.xlu0 %1299, %v514
        %v1301 = vpop.permute.xlu0 %1300
        %1303 = vset.pattern.permute.xlu0 5
        %1304 = vperm.xlu0 %1303, %v515
        %v1305 = vpop.permute.xlu0 %1304
        %v1307 = vmul.f32 %v1265, %v1285
        %v1308 = vmul.f32 %v1266, %v1285
        %v1309 = vmul.f32 %v1267, %v1285
        %v1310 = vmul.f32 %v1268, %v1289
        %v1311 = vmul.f32 %v1269, %v1289
        %v1312 = vmul.f32 %v1270, %v1289
        %v1313 = vmul.f32 %v1271, %v1293
        %v1314 = vmul.f32 %v1272, %v1293
        %v1315 = vmul.f32 %v1273, %v1293
        %v1316 = vmul.f32 %v1274, %v1297
        %v1317 = vmul.f32 %v1275, %v1297
        %v1318 = vmul.f32 %v1276, %v1297
        %v1319 = vmul.f32 %v1277, %v1301
        %v1320 = vmul.f32 %v1278, %v1301
        %v1321 = vmul.f32 %v1279, %v1301
        %v1322 = vmul.f32 %v1280, %v1305
        %v1323 = vmul.f32 %v1281, %v1305
        %v1324 = vmul.f32 %v1282, %v1305
        %1343 = vrot.lane.b32.xlu0 %v1307, 110
        %v1344 = vpop.permute.xlu0 %1343
        %1345 = vrot.lane.b32.xlu0 %v1308, 110
        %v1346 = vpop.permute.xlu0 %1345
        %1347 = vrot.lane.b32.xlu0 %v1309, 110
        %v1348 = vpop.permute.xlu0 %1347
        %1349 = vrot.lane.b32.xlu0 %v1310, 110
        %v1350 = vpop.permute.xlu0 %1349
        %1351 = vrot.lane.b32.xlu0 %v1311, 110
        %v1352 = vpop.permute.xlu0 %1351
        %1353 = vrot.lane.b32.xlu0 %v1312, 110
        %v1354 = vpop.permute.xlu0 %1353
        %1355 = vrot.lane.b32.xlu0 %v1313, 110
        %v1356 = vpop.permute.xlu0 %1355
        %1357 = vrot.lane.b32.xlu0 %v1314, 110
        %v1358 = vpop.permute.xlu0 %1357
        %1359 = vrot.lane.b32.xlu0 %v1315, 110
        %v1360 = vpop.permute.xlu0 %1359
        %1361 = vrot.lane.b32.xlu0 %v1316, 110
        %v1362 = vpop.permute.xlu0 %1361
        %1363 = vrot.lane.b32.xlu0 %v1317, 110
        %v1364 = vpop.permute.xlu0 %1363
        %1365 = vrot.lane.b32.xlu0 %v1318, 110
        %v1366 = vpop.permute.xlu0 %1365
        %1367 = vrot.lane.b32.xlu0 %v1319, 110
        %v1368 = vpop.permute.xlu0 %1367
        %1369 = vrot.lane.b32.xlu0 %v1320, 110
        %v1370 = vpop.permute.xlu0 %1369
        %1371 = vrot.lane.b32.xlu0 %v1321, 110
        %v1372 = vpop.permute.xlu0 %1371
        %1373 = vrot.lane.b32.xlu0 %v1322, 110
        %v1374 = vpop.permute.xlu0 %1373
        %1375 = vrot.lane.b32.xlu0 %v1323, 110
        %v1376 = vpop.permute.xlu0 %1375
        %1377 = vrot.lane.b32.xlu0 %v1324, 110
        %v1378 = vpop.permute.xlu0 %1377
        %vm1379 = vcmask 900096
        %v1380 = vsel %vm1379, %v1344, %v1346
        %v1381 = vsel %vm1379, %v1346, %v1348
        %v1382 = vsel %vm1379, %v1350, %v1352
        %v1383 = vsel %vm1379, %v1352, %v1354
        %v1384 = vsel %vm1379, %v1356, %v1358
        %v1385 = vsel %vm1379, %v1358, %v1360
        %v1386 = vsel %vm1379, %v1362, %v1364
        %v1387 = vsel %vm1379, %v1364, %v1366
        %v1388 = vsel %vm1379, %v1368, %v1370
        %v1389 = vsel %vm1379, %v1370, %v1372
        %v1390 = vsel %vm1379, %v1374, %v1376
        %v1391 = vsel %vm1379, %v1376, %v1378
        %v1410 = vadd.f32 %v1220, %v1344
        %v1411 = vadd.f32 %v1221, %v1380
        %v1412 = vadd.f32 %v1222, %v1381
        %v1413 = vadd.f32 %v1223, %v1350
        %v1414 = vadd.f32 %v1224, %v1382
        %v1415 = vadd.f32 %v1225, %v1383
        %v1416 = vadd.f32 %v1226, %v1356
        %v1417 = vadd.f32 %v1227, %v1384
        %v1418 = vadd.f32 %v1228, %v1385
        %v1419 = vadd.f32 %v1229, %v1362
        %v1420 = vadd.f32 %v1230, %v1386
        %v1421 = vadd.f32 %v1231, %v1387
        %v1422 = vadd.f32 %v1232, %v1368
        %v1423 = vadd.f32 %v1233, %v1388
        %v1424 = vadd.f32 %v1234, %v1389
        %v1425 = vadd.f32 %v1235, %v1374
        %v1426 = vadd.f32 %v1236, %v1390
        %v1427 = vadd.f32 %v1237, %v1391
        %1428 = vrot.lane.b32.xlu0 %v538, 15
        %v1429 = vpop.permute.xlu0 %1428
        %1430 = vrot.lane.b32.xlu0 %v539, 15
        %v1431 = vpop.permute.xlu0 %1430
        %vm1432 = vcmask 121856
        %v1433 = vsel %vm1432, %v1429, %v1431
        %v1437 = vmul.f32 %v1238, %v1429
        %v1438 = vmul.f32 %v1239, %v1433
        %v1439 = vmul.f32 %v1240, %v1431
        %v1440 = vmul.f32 %v1241, %v1429
        %v1441 = vmul.f32 %v1242, %v1433
        %v1442 = vmul.f32 %v1243, %v1431
        %v1443 = vmul.f32 %v1244, %v1429
        %v1444 = vmul.f32 %v1245, %v1433
        %v1445 = vmul.f32 %v1246, %v1431
        %v1446 = vmul.f32 %v1247, %v1429
        %v1447 = vmul.f32 %v1248, %v1433
        %v1448 = vmul.f32 %v1249, %v1431
        %v1449 = vmul.f32 %v1250, %v1429
        %v1450 = vmul.f32 %v1251, %v1433
        %v1451 = vmul.f32 %v1252, %v1431
        %v1452 = vmul.f32 %v1253, %v1429
        %v1453 = vmul.f32 %v1254, %v1433
        %v1454 = vmul.f32 %v1255, %v1431
        %1455 = vset.pattern.permute.xlu0 6
        %1456 = vperm.xlu0 %1455, %v510
        %v1457 = vpop.permute.xlu0 %1456
        %1459 = vset.pattern.permute.xlu0 6
        %1460 = vperm.xlu0 %1459, %v511
        %v1461 = vpop.permute.xlu0 %1460
        %1463 = vset.pattern.permute.xlu0 6
        %1464 = vperm.xlu0 %1463, %v512
        %v1465 = vpop.permute.xlu0 %1464
        %1467 = vset.pattern.permute.xlu0 6
        %1468 = vperm.xlu0 %1467, %v513
        %v1469 = vpop.permute.xlu0 %1468
        %1471 = vset.pattern.permute.xlu0 6
        %1472 = vperm.xlu0 %1471, %v514
        %v1473 = vpop.permute.xlu0 %1472
        %1475 = vset.pattern.permute.xlu0 6
        %1476 = vperm.xlu0 %1475, %v515
        %v1477 = vpop.permute.xlu0 %1476
        %v1479 = vmul.f32 %v1437, %v1457
        %v1480 = vmul.f32 %v1438, %v1457
        %v1481 = vmul.f32 %v1439, %v1457
        %v1482 = vmul.f32 %v1440, %v1461
        %v1483 = vmul.f32 %v1441, %v1461
        %v1484 = vmul.f32 %v1442, %v1461
        %v1485 = vmul.f32 %v1443, %v1465
        %v1486 = vmul.f32 %v1444, %v1465
        %v1487 = vmul.f32 %v1445, %v1465
        %v1488 = vmul.f32 %v1446, %v1469
        %v1489 = vmul.f32 %v1447, %v1469
        %v1490 = vmul.f32 %v1448, %v1469
        %v1491 = vmul.f32 %v1449, %v1473
        %v1492 = vmul.f32 %v1450, %v1473
        %v1493 = vmul.f32 %v1451, %v1473
        %v1494 = vmul.f32 %v1452, %v1477
        %v1495 = vmul.f32 %v1453, %v1477
        %v1496 = vmul.f32 %v1454, %v1477
        %1515 = vrot.lane.b32.xlu0 %v1479, 96
        %v1516 = vpop.permute.xlu0 %1515
        %1517 = vrot.lane.b32.xlu0 %v1480, 96
        %v1518 = vpop.permute.xlu0 %1517
        %1519 = vrot.lane.b32.xlu0 %v1481, 96
        %v1520 = vpop.permute.xlu0 %1519
        %1521 = vrot.lane.b32.xlu0 %v1482, 96
        %v1522 = vpop.permute.xlu0 %1521
        %1523 = vrot.lane.b32.xlu0 %v1483, 96
        %v1524 = vpop.permute.xlu0 %1523
        %1525 = vrot.lane.b32.xlu0 %v1484, 96
        %v1526 = vpop.permute.xlu0 %1525
        %1527 = vrot.lane.b32.xlu0 %v1485, 96
        %v1528 = vpop.permute.xlu0 %1527
        %1529 = vrot.lane.b32.xlu0 %v1486, 96
        %v1530 = vpop.permute.xlu0 %1529
        %1531 = vrot.lane.b32.xlu0 %v1487, 96
        %v1532 = vpop.permute.xlu0 %1531
        %1533 = vrot.lane.b32.xlu0 %v1488, 96
        %v1534 = vpop.permute.xlu0 %1533
        %1535 = vrot.lane.b32.xlu0 %v1489, 96
        %v1536 = vpop.permute.xlu0 %1535
        %1537 = vrot.lane.b32.xlu0 %v1490, 96
        %v1538 = vpop.permute.xlu0 %1537
        %1539 = vrot.lane.b32.xlu0 %v1491, 96
        %v1540 = vpop.permute.xlu0 %1539
        %1541 = vrot.lane.b32.xlu0 %v1492, 96
        %v1542 = vpop.permute.xlu0 %1541
        %1543 = vrot.lane.b32.xlu0 %v1493, 96
        %v1544 = vpop.permute.xlu0 %1543
        %1545 = vrot.lane.b32.xlu0 %v1494, 96
        %v1546 = vpop.permute.xlu0 %1545
        %1547 = vrot.lane.b32.xlu0 %v1495, 96
        %v1548 = vpop.permute.xlu0 %1547
        %1549 = vrot.lane.b32.xlu0 %v1496, 96
        %v1550 = vpop.permute.xlu0 %1549
        %vm1551 = vcmask 785408
        %v1552 = vsel %vm1551, %v1516, %v1518
        %v1553 = vsel %vm1551, %v1518, %v1520
        %v1554 = vsel %vm1551, %v1522, %v1524
        %v1555 = vsel %vm1551, %v1524, %v1526
        %v1556 = vsel %vm1551, %v1528, %v1530
        %v1557 = vsel %vm1551, %v1530, %v1532
        %v1558 = vsel %vm1551, %v1534, %v1536
        %v1559 = vsel %vm1551, %v1536, %v1538
        %v1560 = vsel %vm1551, %v1540, %v1542
        %v1561 = vsel %vm1551, %v1542, %v1544
        %v1562 = vsel %vm1551, %v1546, %v1548
        %v1563 = vsel %vm1551, %v1548, %v1550
        %v1582 = vadd.f32 %v1410, %v1516
        %v1583 = vadd.f32 %v1411, %v1552
        %v1584 = vadd.f32 %v1412, %v1553
        %v1585 = vadd.f32 %v1413, %v1522
        %v1586 = vadd.f32 %v1414, %v1554
        %v1587 = vadd.f32 %v1415, %v1555
        %v1588 = vadd.f32 %v1416, %v1528
        %v1589 = vadd.f32 %v1417, %v1556
        %v1590 = vadd.f32 %v1418, %v1557
        %v1591 = vadd.f32 %v1419, %v1534
        %v1592 = vadd.f32 %v1420, %v1558
        %v1593 = vadd.f32 %v1421, %v1559
        %v1594 = vadd.f32 %v1422, %v1540
        %v1595 = vadd.f32 %v1423, %v1560
        %v1596 = vadd.f32 %v1424, %v1561
        %v1597 = vadd.f32 %v1425, %v1546
        %v1598 = vadd.f32 %v1426, %v1562
        %v1599 = vadd.f32 %v1427, %v1563
        %1600 = vset.pattern.permute.xlu0 7
        %1601 = vperm.xlu0 %1600, %v510
        %v1602 = vpop.permute.xlu0 %1601
        %1604 = vset.pattern.permute.xlu0 7
        %1605 = vperm.xlu0 %1604, %v511
        %v1606 = vpop.permute.xlu0 %1605
        %1608 = vset.pattern.permute.xlu0 7
        %1609 = vperm.xlu0 %1608, %v512
        %v1610 = vpop.permute.xlu0 %1609
        %1612 = vset.pattern.permute.xlu0 7
        %1613 = vperm.xlu0 %1612, %v513
        %v1614 = vpop.permute.xlu0 %1613
        %1616 = vset.pattern.permute.xlu0 7
        %1617 = vperm.xlu0 %1616, %v514
        %v1618 = vpop.permute.xlu0 %1617
        %1620 = vset.pattern.permute.xlu0 7
        %1621 = vperm.xlu0 %1620, %v515
        %v1622 = vpop.permute.xlu0 %1621
        %v1624 = vmul.f32 %v1238, %v1602
        %v1625 = vmul.f32 %v1239, %v1602
        %v1626 = vmul.f32 %v1240, %v1602
        %v1627 = vmul.f32 %v1241, %v1606
        %v1628 = vmul.f32 %v1242, %v1606
        %v1629 = vmul.f32 %v1243, %v1606
        %v1630 = vmul.f32 %v1244, %v1610
        %v1631 = vmul.f32 %v1245, %v1610
        %v1632 = vmul.f32 %v1246, %v1610
        %v1633 = vmul.f32 %v1247, %v1614
        %v1634 = vmul.f32 %v1248, %v1614
        %v1635 = vmul.f32 %v1249, %v1614
        %v1636 = vmul.f32 %v1250, %v1618
        %v1637 = vmul.f32 %v1251, %v1618
        %v1638 = vmul.f32 %v1252, %v1618
        %v1639 = vmul.f32 %v1253, %v1622
        %v1640 = vmul.f32 %v1254, %v1622
        %v1641 = vmul.f32 %v1255, %v1622
        %1660 = vrot.lane.b32.xlu0 %v1624, 95
        %v1661 = vpop.permute.xlu0 %1660
        %1662 = vrot.lane.b32.xlu0 %v1625, 95
        %v1663 = vpop.permute.xlu0 %1662
        %1664 = vrot.lane.b32.xlu0 %v1626, 95
        %v1665 = vpop.permute.xlu0 %1664
        %1666 = vrot.lane.b32.xlu0 %v1627, 95
        %v1667 = vpop.permute.xlu0 %1666
        %1668 = vrot.lane.b32.xlu0 %v1628, 95
        %v1669 = vpop.permute.xlu0 %1668
        %1670 = vrot.lane.b32.xlu0 %v1629, 95
        %v1671 = vpop.permute.xlu0 %1670
        %1672 = vrot.lane.b32.xlu0 %v1630, 95
        %v1673 = vpop.permute.xlu0 %1672
        %1674 = vrot.lane.b32.xlu0 %v1631, 95
        %v1675 = vpop.permute.xlu0 %1674
        %1676 = vrot.lane.b32.xlu0 %v1632, 95
        %v1677 = vpop.permute.xlu0 %1676
        %1678 = vrot.lane.b32.xlu0 %v1633, 95
        %v1679 = vpop.permute.xlu0 %1678
        %1680 = vrot.lane.b32.xlu0 %v1634, 95
        %v1681 = vpop.permute.xlu0 %1680
        %1682 = vrot.lane.b32.xlu0 %v1635, 95
        %v1683 = vpop.permute.xlu0 %1682
        %1684 = vrot.lane.b32.xlu0 %v1636, 95
        %v1685 = vpop.permute.xlu0 %1684
        %1686 = vrot.lane.b32.xlu0 %v1637, 95
        %v1687 = vpop.permute.xlu0 %1686
        %1688 = vrot.lane.b32.xlu0 %v1638, 95
        %v1689 = vpop.permute.xlu0 %1688
        %1690 = vrot.lane.b32.xlu0 %v1639, 95
        %v1691 = vpop.permute.xlu0 %1690
        %1692 = vrot.lane.b32.xlu0 %v1640, 95
        %v1693 = vpop.permute.xlu0 %1692
        %1694 = vrot.lane.b32.xlu0 %v1641, 95
        %v1695 = vpop.permute.xlu0 %1694
        %vm1696 = vcmask 777216
        %v1697 = vsel %vm1696, %v1661, %v1663
        %v1698 = vsel %vm1696, %v1663, %v1665
        %v1699 = vsel %vm1696, %v1667, %v1669
        %v1700 = vsel %vm1696, %v1669, %v1671
        %v1701 = vsel %vm1696, %v1673, %v1675
        %v1702 = vsel %vm1696, %v1675, %v1677
        %v1703 = vsel %vm1696, %v1679, %v1681
        %v1704 = vsel %vm1696, %v1681, %v1683
        %v1705 = vsel %vm1696, %v1685, %v1687
        %v1706 = vsel %vm1696, %v1687, %v1689
        %v1707 = vsel %vm1696, %v1691, %v1693
        %v1708 = vsel %vm1696, %v1693, %v1695
        %v1727 = vadd.f32 %v1582, %v1661
        %v1728 = vadd.f32 %v1583, %v1697
        %v1729 = vadd.f32 %v1584, %v1698
        %v1730 = vadd.f32 %v1585, %v1667
        %v1731 = vadd.f32 %v1586, %v1699
        %v1732 = vadd.f32 %v1587, %v1700
        %v1733 = vadd.f32 %v1588, %v1673
        %v1734 = vadd.f32 %v1589, %v1701
        %v1735 = vadd.f32 %v1590, %v1702
        %v1736 = vadd.f32 %v1591, %v1679
        %v1737 = vadd.f32 %v1592, %v1703
        %v1738 = vadd.f32 %v1593, %v1704
        %v1739 = vadd.f32 %v1594, %v1685
        %v1740 = vadd.f32 %v1595, %v1705
        %v1741 = vadd.f32 %v1596, %v1706
        %v1742 = vadd.f32 %v1597, %v1691
        %v1743 = vadd.f32 %v1598, %v1707
        %v1744 = vadd.f32 %v1599, %v1708
        %1745 = vrot.lane.b32.xlu0 %v779, 17
        %v1746 = vpop.permute.xlu0 %1745
        %1747 = vrot.lane.b32.xlu0 %v780, 17
        %v1748 = vpop.permute.xlu0 %1747
        %vm1749 = vcmask 138240
        %v1750 = vsel %vm1749, %v1746, %v1748
        %v1754 = vmul.f32 %v1238, %v1746
        %v1755 = vmul.f32 %v1239, %v1750
        %v1756 = vmul.f32 %v1240, %v1748
        %v1757 = vmul.f32 %v1241, %v1746
        %v1758 = vmul.f32 %v1242, %v1750
        %v1759 = vmul.f32 %v1243, %v1748
        %v1760 = vmul.f32 %v1244, %v1746
        %v1761 = vmul.f32 %v1245, %v1750
        %v1762 = vmul.f32 %v1246, %v1748
        %v1763 = vmul.f32 %v1247, %v1746
        %v1764 = vmul.f32 %v1248, %v1750
        %v1765 = vmul.f32 %v1249, %v1748
        %v1766 = vmul.f32 %v1250, %v1746
        %v1767 = vmul.f32 %v1251, %v1750
        %v1768 = vmul.f32 %v1252, %v1748
        %v1769 = vmul.f32 %v1253, %v1746
        %v1770 = vmul.f32 %v1254, %v1750
        %v1771 = vmul.f32 %v1255, %v1748
        %1772 = vset.pattern.permute.xlu0 8
        %1773 = vperm.xlu0 %1772, %v510
        %v1774 = vpop.permute.xlu0 %1773
        %1776 = vset.pattern.permute.xlu0 8
        %1777 = vperm.xlu0 %1776, %v511
        %v1778 = vpop.permute.xlu0 %1777
        %1780 = vset.pattern.permute.xlu0 8
        %1781 = vperm.xlu0 %1780, %v512
        %v1782 = vpop.permute.xlu0 %1781
        %1784 = vset.pattern.permute.xlu0 8
        %1785 = vperm.xlu0 %1784, %v513
        %v1786 = vpop.permute.xlu0 %1785
        %1788 = vset.pattern.permute.xlu0 8
        %1789 = vperm.xlu0 %1788, %v514
        %v1790 = vpop.permute.xlu0 %1789
        %1792 = vset.pattern.permute.xlu0 8
        %1793 = vperm.xlu0 %1792, %v515
        %v1794 = vpop.permute.xlu0 %1793
        %v1796 = vmul.f32 %v1754, %v1774
        %v1797 = vmul.f32 %v1755, %v1774
        %v1798 = vmul.f32 %v1756, %v1774
        %v1799 = vmul.f32 %v1757, %v1778
        %v1800 = vmul.f32 %v1758, %v1778
        %v1801 = vmul.f32 %v1759, %v1778
        %v1802 = vmul.f32 %v1760, %v1782
        %v1803 = vmul.f32 %v1761, %v1782
        %v1804 = vmul.f32 %v1762, %v1782
        %v1805 = vmul.f32 %v1763, %v1786
        %v1806 = vmul.f32 %v1764, %v1786
        %v1807 = vmul.f32 %v1765, %v1786
        %v1808 = vmul.f32 %v1766, %v1790
        %v1809 = vmul.f32 %v1767, %v1790
        %v1810 = vmul.f32 %v1768, %v1790
        %v1811 = vmul.f32 %v1769, %v1794
        %v1812 = vmul.f32 %v1770, %v1794
        %v1813 = vmul.f32 %v1771, %v1794
        %1832 = vrot.lane.b32.xlu0 %v1796, 94
        %v1833 = vpop.permute.xlu0 %1832
        %1834 = vrot.lane.b32.xlu0 %v1797, 94
        %v1835 = vpop.permute.xlu0 %1834
        %1836 = vrot.lane.b32.xlu0 %v1798, 94
        %v1837 = vpop.permute.xlu0 %1836
        %1838 = vrot.lane.b32.xlu0 %v1799, 94
        %v1839 = vpop.permute.xlu0 %1838
        %1840 = vrot.lane.b32.xlu0 %v1800, 94
        %v1841 = vpop.permute.xlu0 %1840
        %1842 = vrot.lane.b32.xlu0 %v1801, 94
        %v1843 = vpop.permute.xlu0 %1842
        %1844 = vrot.lane.b32.xlu0 %v1802, 94
        %v1845 = vpop.permute.xlu0 %1844
        %1846 = vrot.lane.b32.xlu0 %v1803, 94
        %v1847 = vpop.permute.xlu0 %1846
        %1848 = vrot.lane.b32.xlu0 %v1804, 94
        %v1849 = vpop.permute.xlu0 %1848
        %1850 = vrot.lane.b32.xlu0 %v1805, 94
        %v1851 = vpop.permute.xlu0 %1850
        %1852 = vrot.lane.b32.xlu0 %v1806, 94
        %v1853 = vpop.permute.xlu0 %1852
        %1854 = vrot.lane.b32.xlu0 %v1807, 94
        %v1855 = vpop.permute.xlu0 %1854
        %1856 = vrot.lane.b32.xlu0 %v1808, 94
        %v1857 = vpop.permute.xlu0 %1856
        %1858 = vrot.lane.b32.xlu0 %v1809, 94
        %v1859 = vpop.permute.xlu0 %1858
        %1860 = vrot.lane.b32.xlu0 %v1810, 94
        %v1861 = vpop.permute.xlu0 %1860
        %1862 = vrot.lane.b32.xlu0 %v1811, 94
        %v1863 = vpop.permute.xlu0 %1862
        %1864 = vrot.lane.b32.xlu0 %v1812, 94
        %v1865 = vpop.permute.xlu0 %1864
        %1866 = vrot.lane.b32.xlu0 %v1813, 94
        %v1867 = vpop.permute.xlu0 %1866
        %vm1868 = vcmask 769024
        %v1869 = vsel %vm1868, %v1833, %v1835
        %v1870 = vsel %vm1868, %v1835, %v1837
        %v1871 = vsel %vm1868, %v1839, %v1841
        %v1872 = vsel %vm1868, %v1841, %v1843
        %v1873 = vsel %vm1868, %v1845, %v1847
        %v1874 = vsel %vm1868, %v1847, %v1849
        %v1875 = vsel %vm1868, %v1851, %v1853
        %v1876 = vsel %vm1868, %v1853, %v1855
        %v1877 = vsel %vm1868, %v1857, %v1859
        %v1878 = vsel %vm1868, %v1859, %v1861
        %v1879 = vsel %vm1868, %v1863, %v1865
        %v1880 = vsel %vm1868, %v1865, %v1867
        %v1899 = vadd.f32 %v1727, %v1833
        %v1900 = vadd.f32 %v1728, %v1869
        %v1901 = vadd.f32 %v1729, %v1870
        %v1902 = vadd.f32 %v1730, %v1839
        %v1903 = vadd.f32 %v1731, %v1871
        %v1904 = vadd.f32 %v1732, %v1872
        %v1905 = vadd.f32 %v1733, %v1845
        %v1906 = vadd.f32 %v1734, %v1873
        %v1907 = vadd.f32 %v1735, %v1874
        %v1908 = vadd.f32 %v1736, %v1851
        %v1909 = vadd.f32 %v1737, %v1875
        %v1910 = vadd.f32 %v1738, %v1876
        %v1911 = vadd.f32 %v1739, %v1857
        %v1912 = vadd.f32 %v1740, %v1877
        %v1913 = vadd.f32 %v1741, %v1878
        %v1914 = vadd.f32 %v1742, %v1863
        %v1915 = vadd.f32 %v1743, %v1879
        %v1916 = vadd.f32 %v1744, %v1880
        %v1917 = vld [vmem:[%s4] sm:$0xff]
        %v1918 = vld [vmem:[%s4 + $0x8] sm:$0xff]
        %v1919 = vld [vmem:[%s4 + $0x10] sm:$0xff]
        %v1920 = vld [vmem:[%s4 + $0x18] sm:$0xff]
        %v1921 = vld [vmem:[%s4 + $0x20] sm:$0xff]
        %v1922 = vld [vmem:[%s4 + $0x28] sm:$0xff]
        %1924 = vset.pattern.permute.xlu0 0
        %1925 = vperm.xlu0 %1924, %v1917
        %v1926 = vpop.permute.xlu0 %1925
        %1929 = vset.pattern.permute.xlu0 0
        %1930 = vperm.xlu0 %1929, %v1918
        %v1931 = vpop.permute.xlu0 %1930
        %1934 = vset.pattern.permute.xlu0 0
        %1935 = vperm.xlu0 %1934, %v1919
        %v1936 = vpop.permute.xlu0 %1935
        %1939 = vset.pattern.permute.xlu0 0
        %1940 = vperm.xlu0 %1939, %v1920
        %v1941 = vpop.permute.xlu0 %1940
        %1944 = vset.pattern.permute.xlu0 0
        %1945 = vperm.xlu0 %1944, %v1921
        %v1946 = vpop.permute.xlu0 %1945
        %1949 = vset.pattern.permute.xlu0 0
        %1950 = vperm.xlu0 %1949, %v1922
        %v1951 = vpop.permute.xlu0 %1950
        %v1953 = vadd.f32 %v1899, %v1926
        %v1954 = vadd.f32 %v1900, %v1926
        %v1955 = vadd.f32 %v1901, %v1926
        %v1956 = vadd.f32 %v1902, %v1931
        %v1957 = vadd.f32 %v1903, %v1931
        %v1958 = vadd.f32 %v1904, %v1931
        %v1959 = vadd.f32 %v1905, %v1936
        %v1960 = vadd.f32 %v1906, %v1936
        %v1961 = vadd.f32 %v1907, %v1936
        %v1962 = vadd.f32 %v1908, %v1941
        %v1963 = vadd.f32 %v1909, %v1941
        %v1964 = vadd.f32 %v1910, %v1941
        %v1965 = vadd.f32 %v1911, %v1946
        %v1966 = vadd.f32 %v1912, %v1946
        %v1967 = vadd.f32 %v1913, %v1946
        %v1968 = vadd.f32 %v1914, %v1951
        %v1969 = vadd.f32 %v1915, %v1951
        %v1970 = vadd.f32 %v1916, %v1951
        %v1971 = vmul.f32 %v1953, %v1953
        %v1972 = vmul.f32 %v1954, %v1954
        %v1973 = vmul.f32 %v1955, %v1955
        %v1974 = vmul.f32 %v1956, %v1956
        %v1975 = vmul.f32 %v1957, %v1957
        %v1976 = vmul.f32 %v1958, %v1958
        %1983 = vrot.lane.b32.xlu0 %v1971, 17
        %v1984 = vpop.permute.xlu0 %1983
        %1985 = vrot.lane.b32.xlu0 %v1972, 17
        %v1986 = vpop.permute.xlu0 %1985
        %1987 = vrot.lane.b32.xlu0 %v1973, 17
        %v1988 = vpop.permute.xlu0 %1987
        %1989 = vrot.lane.b32.xlu0 %v1974, 17
        %v1990 = vpop.permute.xlu0 %1989
        %1991 = vrot.lane.b32.xlu0 %v1975, 17
        %v1992 = vpop.permute.xlu0 %1991
        %1993 = vrot.lane.b32.xlu0 %v1976, 17
        %v1994 = vpop.permute.xlu0 %1993
        %v1995 = vsel %vm1749, %v1984, %v1986
        %v1996 = vsel %vm1749, %v1986, %v1988
        %v1997 = vsel %vm1749, %v1990, %v1992
        %v1998 = vsel %vm1749, %v1992, %v1994
        %v2003 = vadd.f32 %v1995, %v1996
        %2004 = vadd.xlane.f32.xlu0 %v2003
        %v2005 = vpop.xlane.xlu0 %2004
        %v2006 = vadd.f32 %v1997, %v1998
        %2007 = vadd.xlane.f32.xlu0 %v2006
        %v2008 = vpop.xlane.xlu0 %2007
        %v2009 = vadd.f32 %v2005, 1e-12
        %v2010 = vadd.f32 %v2008, 1e-12
        %v2011 = vrsqrt.pop %v2009
        %v2012 = vmul.f32 %v2011, %v2009
        %v2013 = vmul.f32 %v2012, %v2011
        %v2014 = vmul.f32 0.5, %v2013
        %v2015 = vsub.f32 1.5, %v2014
        %v2016 = vmul.f32 %v2011, %v2015
        %vm2017 = vweird.f32 %v2009
        %vm2018 = vweird.f32 %v2011
        %vm2019 = vmor %vm2017, %vm2018
        %v2020 = vsel %vm2019, %v2011, %v2016
        %v2021 = vrsqrt.pop %v2010
        %v2022 = vmul.f32 %v2021, %v2010
        %v2023 = vmul.f32 %v2022, %v2021
        %v2024 = vmul.f32 0.5, %v2023
        %v2025 = vsub.f32 1.5, %v2024
        %v2026 = vmul.f32 %v2021, %v2025
        %vm2027 = vweird.f32 %v2010
        %vm2028 = vweird.f32 %v2021
        %vm2029 = vmor %vm2027, %vm2028
        %v2030 = vsel %vm2029, %v2021, %v2026
        %v2031 = vmul.f32 %v1953, %v2020
        %v2032 = vmul.f32 %v1954, %v2020
        %v2033 = vmul.f32 %v1955, %v2020
        %v2034 = vmul.f32 %v1956, %v2030
        %v2035 = vmul.f32 %v1957, %v2030
        %v2036 = vmul.f32 %v1958, %v2030
        %v2037 = vpack.c.bf16 %v2034, %v2031
        %v2038 = vpack.c.bf16 %v2035, %v2032
        %v2039 = vpack.c.bf16 %v2036, %v2033
        %v2040 = vmul.f32 %v1959, %v1959
        %v2041 = vmul.f32 %v1960, %v1960
        %v2042 = vmul.f32 %v1961, %v1961
        %v2043 = vmul.f32 %v1962, %v1962
        %v2044 = vmul.f32 %v1963, %v1963
        %v2045 = vmul.f32 %v1964, %v1964
        %2052 = vrot.lane.b32.xlu0 %v2040, 17
        %v2053 = vpop.permute.xlu0 %2052
        %2054 = vrot.lane.b32.xlu0 %v2041, 17
        %v2055 = vpop.permute.xlu0 %2054
        %2056 = vrot.lane.b32.xlu0 %v2042, 17
        %v2057 = vpop.permute.xlu0 %2056
        %2058 = vrot.lane.b32.xlu0 %v2043, 17
        %v2059 = vpop.permute.xlu0 %2058
        %2060 = vrot.lane.b32.xlu0 %v2044, 17
        %v2061 = vpop.permute.xlu0 %2060
        %2062 = vrot.lane.b32.xlu0 %v2045, 17
        %v2063 = vpop.permute.xlu0 %2062
        %v2064 = vsel %vm1749, %v2053, %v2055
        %v2065 = vsel %vm1749, %v2055, %v2057
        %v2066 = vsel %vm1749, %v2059, %v2061
        %v2067 = vsel %vm1749, %v2061, %v2063
        %v2072 = vadd.f32 %v2064, %v2065
        %2073 = vadd.xlane.f32.xlu0 %v2072
        %v2074 = vpop.xlane.xlu0 %2073
        %v2075 = vadd.f32 %v2066, %v2067
        %2076 = vadd.xlane.f32.xlu0 %v2075
        %v2077 = vpop.xlane.xlu0 %2076
        %v2078 = vadd.f32 %v2074, 1e-12
        %v2079 = vadd.f32 %v2077, 1e-12
        %v2080 = vrsqrt.pop %v2078
        %v2081 = vmul.f32 %v2080, %v2078
        %v2082 = vmul.f32 %v2081, %v2080
        %v2083 = vmul.f32 0.5, %v2082
        %v2084 = vsub.f32 1.5, %v2083
        %v2085 = vmul.f32 %v2080, %v2084
        %vm2086 = vweird.f32 %v2078
        %vm2087 = vweird.f32 %v2080
        %vm2088 = vmor %vm2086, %vm2087
        %v2089 = vsel %vm2088, %v2080, %v2085
        %v2090 = vrsqrt.pop %v2079
        %v2091 = vmul.f32 %v2090, %v2079
        %v2092 = vmul.f32 %v2091, %v2090
        %v2093 = vmul.f32 0.5, %v2092
        %v2094 = vsub.f32 1.5, %v2093
        %v2095 = vmul.f32 %v2090, %v2094
        %vm2096 = vweird.f32 %v2079
        %vm2097 = vweird.f32 %v2090
        %vm2098 = vmor %vm2096, %vm2097
        %v2099 = vsel %vm2098, %v2090, %v2095
        %v2100 = vmul.f32 %v1959, %v2089
        %v2101 = vmul.f32 %v1960, %v2089
        %v2102 = vmul.f32 %v1961, %v2089
        %v2103 = vmul.f32 %v1962, %v2099
        %v2104 = vmul.f32 %v1963, %v2099
        %v2105 = vmul.f32 %v1964, %v2099
        %v2106 = vpack.c.bf16 %v2103, %v2100
        %v2107 = vpack.c.bf16 %v2104, %v2101
        %v2108 = vpack.c.bf16 %v2105, %v2102
        %2112 = vrot.lane.b32.xlu0 %v2037, 17
        %v2113 = vpop.permute.xlu0 %2112
        %2114 = vrot.lane.b32.xlu0 %v2038, 17
        %v2115 = vpop.permute.xlu0 %2114
        %2116 = vrot.lane.b32.xlu0 %v2039, 17
        %v2117 = vpop.permute.xlu0 %2116
        %vm2118 = vcmask 138240
        %v2119 = vsel %vm2118, %v2113, %v2115
        %v2120 = vsel %vm2118, %v2115, %v2117
        %2126 = vrot.lane.b32.xlu0 %v2106, 17
        %v2127 = vpop.permute.xlu0 %2126
        %2128 = vrot.lane.b32.xlu0 %v2107, 17
        %v2129 = vpop.permute.xlu0 %2128
        %2130 = vrot.lane.b32.xlu0 %v2108, 17
        %v2131 = vpop.permute.xlu0 %2130
        %v2132 = vsel %vm2118, %v2127, %v2129
        %v2133 = vsel %vm2118, %v2129, %v2131
        %2136 = vmatpush.bf16.xpose.msra.mxu0 0
        %2137 = vmatpush.bf16.xpose.msra.mxu0 0
        %2138 = vmatpush.bf16.xpose.msra.mxu0 0
        %2139 = vmatpush.bf16.xpose.msra.mxu0 0
        %2140 = vmatpush.bf16.xpose.msra.mxu0 0
        %2141 = vmatpush.bf16.xpose.msra.mxu0 0
        %2142 = vmatpush.bf16.xpose.msra.mxu0 0
        %2143 = vmatpush.bf16.xpose.msra.mxu0 %v2132
        %2144 = vmatmul.bf16.gmra.mxu0 %v2119
        %v2145 = vpop.f32.mrf.mxu0
        %v2146 = vadd.f32 0.0, %v2145
        %v2147 = vpop.f32.mrf.mxu0
        %v2148 = vadd.f32 0.0, %v2147
        %2149 = vdwg.mxu0
        %2150 = vmatpush.bf16.xpose.msra.mxu0 0
        %2151 = vmatpush.bf16.xpose.msra.mxu0 0
        %2152 = vmatpush.bf16.xpose.msra.mxu0 0
        %2153 = vmatpush.bf16.xpose.msra.mxu0 0
        %2154 = vmatpush.bf16.xpose.msra.mxu0 0
        %2155 = vmatpush.bf16.xpose.msra.mxu0 0
        %2156 = vmatpush.bf16.xpose.msra.mxu0 0
        %2157 = vmatpush.bf16.xpose.msra.mxu0 %v2133
        %2158 = vmatmul.bf16.gmra.mxu0 %v2120
        %v2159 = vpop.f32.mrf.mxu0
        %v2160 = vadd.f32 %v2146, %v2159
        %v2161 = vpop.f32.mrf.mxu0
        %v2162 = vadd.f32 %v2148, %v2161
        %2163 = vdwg.mxu0
        %v2164 = vld [vmem:[%s6] sm:$0xff]
        %v2165 = vld [vmem:[%s6 + $0x8] sm:$0xff]
        %2167 = vset.pattern.permute.xlu0 0
        %2168 = vperm.xlu0 %2167, %v2164
        %v2169 = vpop.permute.xlu0 %2168
        %2172 = vset.pattern.permute.xlu0 0
        %2173 = vperm.xlu0 %2172, %v2165
        %v2174 = vpop.permute.xlu0 %2173
        %v2176 = vmul.f32 %v2160, %v2169
        %v2177 = vmul.f32 %v2162, %v2174
        %v2178 = vld [vmem:[%s7] sm:$0xff]
        %v2179 = vld [vmem:[%s7 + $0x8] sm:$0xff]
        %v2180 = vadd.f32 %v2176, %v2178
        %v2181 = vadd.f32 %v2177, %v2179
        %v2182 = vsel %vm428, %v2180, -inf
        %2183 = vmax.xlane.f32.xlu0 %v2182
        %v2184 = vpop.xlane.xlu0 %2183
        %v2185 = vsel %vm428, %v2181, -inf
        %2186 = vmax.xlane.f32.xlu0 %v2185
        %v2187 = vpop.xlane.xlu0 %2186
        %v2188 = vsub.f32 %v2180, %v2184
        %v2189 = vsub.f32 %v2181, %v2187
        %v2190 = vmul.f32 %v2188, 1.442695
        %v2191 = vpow.pop %v2190
        %v2192 = vmul.f32 %v2189, 1.442695
        %v2193 = vpow.pop %v2192
        %v2194 = vsel %vm428, %v2191, 0.0
        %2195 = vadd.xlane.f32.xlu0 %v2194
        %v2196 = vpop.xlane.xlu0 %2195
        %v2197 = vsel %vm428, %v2193, 0.0
        %2198 = vadd.xlane.f32.xlu0 %v2197
        %v2199 = vpop.xlane.xlu0 %2198
        %v2200 = vrcp.pop %v2196
        %v2201 = vrcp.pop %v2199
        %v2202 = vmul.f32 %v2191, %v2200
        %v2203 = vmul.f32 %v2193, %v2201
        %v2204 = vld [vmem:[%s8] sm:$0xff]
        %v2205 = vld [vmem:[%s8 + $0x8] sm:$0xff]
        %v2207 = vsel %vm428, %v2204, 0
        %v2210 = vsel %vm428, %v2205, 0
        %2212 = vmatpush.msra.mxu0 0.0
        %2213 = vmatpush.msra.mxu0 0.0
        %2214 = vmatpush.msra.mxu0 0.0
        %2215 = vmatpush.msra.mxu0 0.0
        %2216 = vmatpush.msra.mxu0 0.0
        %2217 = vmatpush.msra.mxu0 0.0
        %2218 = vmatpush.msra.mxu0 0.0
        %2219 = vmatpush.msra.mxu0 0.0
        %2220 = vmatpush.msra.mxu0 0.0
        %2221 = vmatpush.msra.mxu0 0.0
        %2222 = vmatpush.msra.mxu0 0.0
        %2223 = vmatpush.msra.mxu0 0.0
        %2224 = vmatpush.msra.mxu0 0.0
        %2225 = vmatpush.msra.mxu0 0.0
        %2226 = vmatpush.msra.mxu0 %v2203
        %2227 = vmatpush.msra.mxu0 %v2202
        %2228 = vmatmul.f32.gmra.mxu0 %v2207
        %v2229 = vpop.f32.mrf.mxu0
        %v2230 = vadd.f32 0.0, %v2229
        %2231 = vmatmul.f32.gmra.mxu0 %v2210
        %v2232 = vpop.f32.mrf.mxu0
        %v2233 = vadd.f32 0.0, %v2232
        %2234 = vdwg.mxu0
        %v2235 = vpack.c.bf16 %v2233, %v2230
        %v2236 = vpack.c.bf16 %v1968, %v1965
        %v2237 = vpack.c.bf16 %v1969, %v1966
        %v2238 = vpack.c.bf16 %v1970, %v1967
        %v2239 = vld [vmem:[%s9] sm:$0xff]
        %v2240 = vld [vmem:[%s9 + $0x8] sm:$0xff]
        %2242 = vset.pattern.permute.xlu0 0
        %2243 = vperm.xlu0 %2242, %v2239
        %v2244 = vpop.permute.xlu0 %2243
        %2247 = vset.pattern.permute.xlu0 0
        %2248 = vperm.xlu0 %2247, %v2240
        %v2249 = vpop.permute.xlu0 %2248
        %2254 = vrot.lane.b32.xlu0 %v2236, 17
        %v2255 = vpop.permute.xlu0 %2254
        %2256 = vrot.lane.b32.xlu0 %v2237, 17
        %v2257 = vpop.permute.xlu0 %2256
        %2258 = vrot.lane.b32.xlu0 %v2238, 17
        %v2259 = vpop.permute.xlu0 %2258
        %v2260 = vsel %vm2118, %v2255, %v2257
        %v2261 = vsel %vm2118, %v2257, %v2259
        %v2265 = vsel %vm428, %v2235, 0
        %2267 = vmatpush.bf16.msra.mxu0 0
        %2268 = vmatpush.bf16.msra.mxu0 0
        %2269 = vmatpush.bf16.msra.mxu0 0
        %2270 = vmatpush.bf16.msra.mxu0 0
        %2271 = vmatpush.bf16.msra.mxu0 0
        %2272 = vmatpush.bf16.msra.mxu0 0
        %2273 = vmatpush.bf16.msra.mxu0 0
        %2274 = vmatpush.bf16.msra.mxu0 %v2260
        %2275 = vmatmul.bf16.gmra.mxu0 %v2265
        %v2276 = vpop.f32.mrf.mxu0
        %v2277 = vadd.f32 %v2244, %v2276
        %v2278 = vpop.f32.mrf.mxu0
        %v2279 = vadd.f32 %v2249, %v2278
        %2280 = vdwg.mxu0
        %2281 = vmatpush.bf16.msra.mxu0 0
        %2282 = vmatpush.bf16.msra.mxu0 0
        %2283 = vmatpush.bf16.msra.mxu0 0
        %2284 = vmatpush.bf16.msra.mxu0 0
        %2285 = vmatpush.bf16.msra.mxu0 0
        %2286 = vmatpush.bf16.msra.mxu0 0
        %2287 = vmatpush.bf16.msra.mxu0 0
        %2288 = vmatpush.bf16.msra.mxu0 %v2261
        %2289 = vmatmul.bf16.gmra.mxu0 %v2265
        %v2290 = vpop.f32.mrf.mxu0
        %v2291 = vadd.f32 %v2244, %v2290
        %v2292 = vpop.f32.mrf.mxu0
        %v2293 = vadd.f32 %v2249, %v2292
        %2294 = vdwg.mxu0
        %2295 = vst [vmem:[%s352] sm:$0xff] %v2277
        %2296 = vst [vmem:[%s352 + $0x8] sm:$0xff] %v2291
        %2297 = vst [vmem:[%s352 + $0x10] sm:$0xff] %v2279
        %2298 = vst [vmem:[%s352 + $0x18] sm:$0xff] %v2293
        %s2299 = sand.u32 %s247, 1
        %s2300 = scalar_lea.sflag [#allocation4], %s2299
        %s2301 = sand.u32 %s247, 1
        %s2302 = smul.addr %s2301, 32
        %s2303 = scalar_lea.vmem [#allocation3], %s2302
        // Predicated region
        $region61: #{tpu_custom_call.1} parent=59 // pred_check
          %p2304 = pneg %p257
        $region62: #{tpu_custom_call.1} parent=59 // pred_check_branch
          %2306 = sbr.rel (%p2304) target = $region64
        $region63: #{tpu_custom_call.1} parent=59 // pred_region
          %2308 = vsyncadd %s2300, 0
          %s2309 = smul.addr %s24, 4
          %s2310 = smul.addr %s2309, 8
          %s2311 = scalar_lea.hbm %s10, %s2310
          %s2312 = sshll.u32 %s2303, 4
          %s2313 = int_to_ptr.vmem [resolvable:$true] %s2312
          %s2314 = sshll.u32 %s2311, 4
          %s2315 = int_to_ptr.hbm [resolvable:$true] %s2314
          %2320 = dma.vmem_to_hbm [thread:$0]  %s2313, 512, %s2315, %s2300, 256, 256, 16
        $region64: #{tpu_custom_call.1} parent=59 // pred_fallthru
          _
      $region60: #{tpu_custom_call.1} parent=5 // pred_fallthru
        _
      %p2321 = scmp.le.s32.totalorder 2, %s19
      // Predicated region
      $region65: #{tpu_custom_call.1} parent=5 // pred_check
        %p2322 = pneg %p2321
      $region66: #{tpu_custom_call.1} parent=5 // pred_check_branch
        %2324 = sbr.rel (%p2322) target = $region68
      $region67: #{tpu_custom_call.1} parent=5 // pred_region
        %s2325 = ssub.s32 %s19, 2
        // Predicated region
        $region69: #{tpu_custom_call.1} parent=67 // pred_check
          %p2326 = pneg %p263
        $region70: #{tpu_custom_call.1} parent=67 // pred_check_branch
          %2328 = sbr.rel (%p2326) target = $region72
        $region71: #{tpu_custom_call.1} parent=67 // pred_region
          %s2329 = sand.u32 %s248, 1
          %s2330 = scalar_lea.sflag [#allocation4], %s2329
          %s2331 = sand.u32 %s248, 1
          %s2332 = smul.addr %s2331, 32
          %s2333 = scalar_lea.vmem [#allocation3], %s2332
          %2335 = dma.done %s2330, 512
        $region72: #{tpu_custom_call.1} parent=67 // pred_fallthru
          _
      $region68: #{tpu_custom_call.1} parent=5 // pred_fallthru
        _
    $region6: #{tpu_custom_call.1} parent=1 // loop_footer
      %s23 = sadd.s32 1, %s19
    $region7: #{tpu_custom_call.1} parent=1 // loop_footer_branch
      %18 = sbr.rel target = $region3
    $region8: #{tpu_custom_call.1} parent=1 // loop_exit
      _
    %2336 = vsyncpa [#allocation4], 1
    %s2337 = scalar_lea.sflag [#allocation4], 1
    %2338 = vsyncpa %s2337, 1

</llo_original>
